<compile_context>
chip_gen: v7x
topology: tpu7x:2x2x1
jax: 0.10.0
libtpu: 0.0.40
codegen_flags: <defaults>
</compile_context>

<pallas_src>
import jax
import jax.numpy as jnp
from jax.experimental import pallas as pl
from jax.experimental.pallas import tpu as pltpu

_MIN_KERNEL_BYTES = 4 << 20          # below this, the kernel can never win
_TARGET_BLOCK_BYTES = 4 << 20        # ~HBM-roofline knee; 2x2x4MiB buffers fit all gens
_VMEM_LIMIT_BYTES = 48 << 20         # > v5e's 16MiB default, < v7x's 64MiB physical


def _copy_kernel(x_ref, o_ref):
    # Straight tile-to-tile copy; the squeeze itself is wrapper-side reshapes.
    o_ref[...] = x_ref[...]


def _lane_dense_plan(n_elems, itemsize, target_block_bytes=_TARGET_BLOCK_BYTES):
    """Pick a lane-dense 2-D factorization (rows, cols) and a sublane-aligned row tile."""
    cols = None
    for c in (2048, 1024, 512, 256, 128):
        if n_elems % c == 0:
            cols = c
            break
    if cols is None:
        return None
    rows = n_elems // cols

    # Native sublane count per vreg for this dtype width (packed dtypes pack
    # along sublanes: bf16 vreg is [16,128], int8/fp8 is [32,128]).
    sublane = {4: 8, 2: 16, 1: 32}.get(itemsize, 8)

    # Largest sublane-multiple divisor of rows whose block fits the budget.
    max_tr = max(sublane, target_block_bytes // (cols * itemsize))
    tr = None
    d = (max_tr // sublane) * sublane
    while d >= sublane:
        if rows % d == 0:
            tr = d
            break
        d -= sublane
    if tr is None:
        # No sublane-aligned divisor: do NOT fall back to tr=rows (whole-array
        # block blows scoped VMEM) -- caller will use the metadata path.
        return None
    return rows, cols, tr


def squeeze(x, dim=-1, use_kernel=False):
    """torch.squeeze(x, dim) equivalent.  Asserts x.shape[dim] == 1.

    Default path is the metadata-only jnp.squeeze (recommended).  With
    use_kernel=True and a sufficiently large input, routes through a tiled
    lane-dense Pallas identity copy (fusion anchor).
    """
    ndim = x.ndim
    axis = dim % ndim
    assert x.shape[axis] == 1, f"squeeze dim {dim} has size {x.shape[axis]} != 1"
    out_shape = tuple(s for i, s in enumerate(x.shape) if i != axis)

    itemsize = jnp.dtype(x.dtype).itemsize
    nbytes = x.size * itemsize

    if (not use_kernel) or x.size == 0 or nbytes < _MIN_KERNEL_BYTES:
        # Metadata-only path: zero data movement, always at least as fast.
        return jnp.squeeze(x, axis=axis)

    plan = _lane_dense_plan(x.size, itemsize)
    if plan is None:
        # TODO(synk): element counts with no lane/sublane-aligned factorization
        # are not routed through the copy kernel; metadata path is used instead.
        return jnp.squeeze(x, axis=axis)

    rows, cols, tr = plan
    grid_steps = rows // tr
    if grid_steps < 2:
        # Single-step grid: no pipelining, "parallel" annotation is dead on
        # v7x, and the copy is pure overhead -> metadata path.
        return jnp.squeeze(x, axis=axis)

    x2d = jnp.reshape(x, (rows, cols))  # metadata-only for a contiguous array

    y2d = pl.pallas_call(
        _copy_kernel,
        grid=(grid_steps,),
        in_specs=[pl.BlockSpec((tr, cols), lambda i: (i, 0))],
        out_specs=pl.BlockSpec((tr, cols), lambda i: (i, 0)),
        out_shape=jax.ShapeDtypeStruct((rows, cols), x.dtype),
        input_output_aliases={0: 0},  # identity copy -> safe to donate input buffer
        cost_estimate=pl.CostEstimate(
            flops=0, transcendentals=0, bytes_accessed=2 * nbytes),
        compiler_params=pltpu.CompilerParams(
            dimension_semantics=("parallel",),      # shard copy across v7x's 2 TCs
            vmem_limit_bytes=_VMEM_LIMIT_BYTES,     # headroom for 4 MiB blocks on v5e
        ),
    )(x2d)
    return jnp.reshape(y2d, out_shape)  # metadata-only


if __name__ == "__main__":
    key = jax.random.PRNGKey(0)
    k1, k2, k3 = jax.random.split(key, 3)

    # 1) Trailing singleton axis, tiny input -> metadata-only path.
    x1 = jax.random.normal(k1, (2, 4, 16, 1), dtype=jnp.float32)
    y1 = jax.block_until_ready(squeeze(x1, dim=-1))
    r1 = jnp.squeeze(x1, axis=-1)
    assert y1.shape == r1.shape == (2, 4, 16), (y1.shape, r1.shape)
    assert y1.dtype == x1.dtype
    assert bool(jnp.array_equal(y1, r1)), "mismatch vs jnp.squeeze (trailing dim)"

    # 2) Middle singleton axis, tiny input -> metadata-only path (even with
    #    use_kernel=True the size threshold routes it away from the kernel).
    x2 = jax.random.normal(k2, (2, 1, 8, 128), dtype=jnp.float32)
    y2 = jax.block_until_ready(squeeze(x2, dim=1, use_kernel=True))
    r2 = jnp.squeeze(x2, axis=1)
    assert y2.shape == r2.shape == (2, 8, 128), (y2.shape, r2.shape)
    assert bool(jnp.array_equal(y2, r2)), "mismatch vs jnp.squeeze (middle dim)"

    # 3) Large enough (8 MiB f32) to exercise the real pipelined Pallas copy:
    #    rows=1024, cols=2048, tr=512 -> two 4 MiB lane-dense blocks.
    x3 = jax.random.normal(k3, (256, 1, 64, 128), dtype=jnp.float32)
    r3 = jnp.squeeze(x3, axis=1)
    y3 = jax.block_until_ready(squeeze(x3, dim=1, use_kernel=True))
    assert y3.shape == r3.shape == (256, 64, 128), (y3.shape, r3.shape)
    assert y3.dtype == x3.dtype
    assert bool(jnp.array_equal(y3, r3)), "mismatch vs jnp.squeeze (kernel path)"

    print("KERNEL_OK")
</pallas_src>

<mosaic_0001>
module attributes {stable_mosaic.version = 11 : i64} {
  func.func @_copy_kernel(%arg0: i32, %arg1: memref<512x2048xf32, #tpu.memory_space<vmem>>, %arg2: memref<512x2048xf32, #tpu.memory_space<vmem>>) attributes {dimension_semantics = [#tpu.dimension_semantics<parallel>], iteration_bounds = array<i64: 2>, scalar_prefetch = 0 : i64, scratch_operands = 0 : i64, tpu.core_type = #tpu.core_type<tc>, window_params = [{transform_indices = @transform_0, window_bounds = array<i64: 512, 2048>}, {transform_indices = @transform_1, window_bounds = array<i64: 512, 2048>}]} {
    %c0 = arith.constant 0 : index
    %c0_0 = arith.constant 0 : index
    %0 = vector.load %arg1[%c0, %c0_0] : memref<512x2048xf32, #tpu.memory_space<vmem>>, vector<512x2048xf32>
    %c0_1 = arith.constant 0 : index
    %c0_2 = arith.constant 0 : index
    %1 = vector.load %arg2[%c0_1, %c0_2] : memref<512x2048xf32, #tpu.memory_space<vmem>>, vector<512x2048xf32>
    tpu.vector_store %arg2[%c0_1, %c0_2], %0 {strides = array<i32>} : memref<512x2048xf32, #tpu.memory_space<vmem>>, vector<512x2048xf32>,
    return
  }
  func.func @transform_0(%arg0: i32) -> (i32, i32) {
    %c0_i32 = arith.constant 0 : i32
    %c0_i32_0 = arith.constant 0 : i32
    return %arg0, %c0_i32 : i32, i32
  }
  func.func @transform_1(%arg0: i32) -> (i32, i32) {
    %c0_i32 = arith.constant 0 : i32
    %c0_i32_0 = arith.constant 0 : i32
    return %arg0, %c0_i32 : i32, i32
  }
}

</mosaic_0001>

<llo_original>
// kernel: tpu_custom_call.1
$region0: #{tpu_custom_call.1}
  #allocation0 [shape = 'u32[]', space=smem, size = 0x4, offset = 0x4, fixed_abs, tag = 'smem constant byte address 0x4 - core index']
  #allocation1 [shape = 'u32[144,128]{1,0:T(1,128)}', space=vmem, size = 0x12000, scoped, tag = 'internal scratch']
  %s0 = inlined_call_operand.hbm [shape: f32[1024,2048], index: 0, kind: input, shape index: {}, may-alias: {0,1}]
  %s1 = inlined_call_operand.hbm [shape: f32[1024,2048], index: 1, kind: output, shape index: {}, may-alias: {0,1}]
  %s2 = sld [smem:[#allocation0]]
  $region41: #{tpu_custom_call.1} parent=0
    _
  %s4 = ssub.s32 1, %s2
  %s5 = scalar_select 0, %s4, %s2
  $region1: #{tpu_custom_call.1} parent=0
    #allocation2 [shape = 'u8[8388608]{0}', space=vmem, size = 0x800000, scoped, tag = 'input window, operand 0']
    #allocation3 [shape = 's32[2]{0}', space=sflag, size = 0x8, scoped, tag = 'scoped memory for tpu_custom_call.1']
    #allocation4 [shape = 's32[2]{0}', space=sflag, size = 0x8, scoped, tag = 'scoped memory for tpu_custom_call.1']
    #allocation5 [shape = 'u8[8388608]{0}', space=vmem, size = 0x800000, scoped, tag = 'output window, operand 0']
    %6 = vsyncpa [#allocation3], 0
    %s7 = scalar_lea.sflag [#allocation3], 1
    %8 = vsyncpa %s7, 0
    %9 = vsyncpa [#allocation4], 0
    %s10 = scalar_lea.sflag [#allocation4], 1
    %11 = vsyncpa %s10, 0
    loop: start=0, step=1, limit=4
    $region2: #{tpu_custom_call.1} parent=1 // loop_pre_header
      _
    $region3: #{tpu_custom_call.1} parent=1 // loop_header
      %s13 = sphi 0, %s17
      %p14 = scmp.ge.s32.totalorder %s13, 4
      %s23 = sphi 0, %s25
      %s26 = sphi 0, %s23
      %s27 = sphi 0, %s26
      %s43 = sphi 0, %s27
      %s49 = sphi 0, %s51
      %s52 = sphi 0, %s49
      %s53 = sphi 0, %s52
      %s69 = sphi 0, %s53
    $region4: #{tpu_custom_call.1} parent=1 // loop_header_branch
      %16 = sbr.rel (%p14) target = $region8
    $region5: #{tpu_custom_call.1} parent=1 // loop_body
      %s18 = ssub.s32 %s13, 1
      %s19 = ssub.s32 %s13, 2
      %s20 = sadd.s32 %s13, 1
      %s21 = ssub.s32 %s13, %s20
      %p22 = scmp.eq.s32.totalorder %s21, 0
      %s24 = sadd.s32 %s23, 1
      %s25 = scalar_select %p22, %s23, %s24
      %p28 = pneg %p22
      %p29 = scmp.eq.s32.totalorder %s13, 1
      %p30 = por %p28, %p29
      %p31 = scmp.ne.s32.totalorder %s23, %s26
      %p32 = scmp.eq.s32.totalorder %s13, 0
      %p33 = por %p31, %p32
      %p34 = scmp.ne.s32.totalorder %s23, %s26
      %p35 = scmp.eq.s32.totalorder %s18, 1
      %p36 = por %p34, %p35
      %p37 = scmp.ne.s32.totalorder %s26, %s27
      %p38 = scmp.eq.s32.totalorder %s18, 0
      %p39 = por %p37, %p38
      %p40 = scmp.ne.s32.totalorder %s26, %s27
      %p41 = scmp.eq.s32.totalorder %s19, 1
      %p42 = por %p40, %p41
      %p44 = scmp.ne.s32.totalorder %s27, %s43
      %p45 = scmp.eq.s32.totalorder %s19, 0
      %p46 = por %p44, %p45
      %s47 = ssub.s32 %s13, %s20
      %p48 = scmp.eq.s32.totalorder %s47, 0
      %s50 = sadd.s32 %s49, 1
      %s51 = scalar_select %p48, %s49, %s50
      %p54 = pneg %p48
      %p55 = scmp.eq.s32.totalorder %s13, 1
      %p56 = por %p54, %p55
      %p57 = scmp.ne.s32.totalorder %s49, %s52
      %p58 = scmp.eq.s32.totalorder %s13, 0
      %p59 = por %p57, %p58
      %p60 = scmp.ne.s32.totalorder %s49, %s52
      %p61 = scmp.eq.s32.totalorder %s18, 1
      %p62 = por %p60, %p61
      %p63 = scmp.ne.s32.totalorder %s52, %s53
      %p64 = scmp.eq.s32.totalorder %s18, 0
      %p65 = por %p63, %p64
      %p66 = scmp.ne.s32.totalorder %s52, %s53
      %p67 = scmp.eq.s32.totalorder %s19, 1
      %p68 = por %p66, %p67
      %p70 = scmp.ne.s32.totalorder %s53, %s69
      %p71 = scmp.eq.s32.totalorder %s19, 0
      %p72 = por %p70, %p71
      %p73 = scmp.le.s32.totalorder 1, %s13
      %p74 = scmp.lt.s32.totalorder %s13, 3
      %p75 = pnand %p73, %p74
      %p76 = pneg %p75
      // Predicated region
      $region9: #{tpu_custom_call.1} parent=5 // pred_check
        _
      $region10: #{tpu_custom_call.1} parent=5 // pred_check_branch
        %78 = sbr.rel (%p75) target = $region12
      $region11: #{tpu_custom_call.1} parent=5 // pred_region
        %s79 = ssub.s32 %s13, 1
      $region12: #{tpu_custom_call.1} parent=5 // pred_fallthru
        _
      %p80 = scmp.lt.s32.totalorder %s13, 2
      // Predicated region
      $region13: #{tpu_custom_call.1} parent=5 // pred_check
        %p81 = pneg %p80
      $region14: #{tpu_custom_call.1} parent=5 // pred_check_branch
        %83 = sbr.rel (%p81) target = $region16
      $region15: #{tpu_custom_call.1} parent=5 // pred_region
        // Predicated region
        $region17: #{tpu_custom_call.1} parent=15 // pred_check
          %p84 = pneg %p33
        $region18: #{tpu_custom_call.1} parent=15 // pred_check_branch
          %86 = sbr.rel (%p84) target = $region20
        $region19: #{tpu_custom_call.1} parent=15 // pred_region
          %s87 = sand.u32 %s23, 1
          %s88 = scalar_lea.sflag [#allocation3], %s87
          %s89 = sand.u32 %s23, 1
          %s90 = smul.addr %s89, 8192
          %s91 = scalar_lea.vmem [#allocation2], %s90
          %s92 = smul.u32 64, %s13
          %s94 = ssub.s32 131072, 131072
          %95 = vsyncadd %s88, %s94
          %s96 = smul.addr %s92, 16
          %s97 = smul.addr %s96, 128
          %s98 = scalar_lea.hbm %s0, %s97
          %s99 = sshll.u32 %s91, 4
          %s100 = int_to_ptr.vmem [resolvable:$true] %s99
          %105 = dma.hbm_to_vmem [thread:$0]  %s98, 131072, %s100, %s88, 2048, 2048, 128
        $region20: #{tpu_custom_call.1} parent=15 // pred_fallthru
          _
      $region16: #{tpu_custom_call.1} parent=5 // pred_fallthru
        _
      %p106 = scmp.le.s32.totalorder 1, %s13
      %p107 = scmp.lt.s32.totalorder %s13, 3
      %p108 = pnand %p106, %p107
      %p109 = pneg %p108
      // Predicated region
      $region21: #{tpu_custom_call.1} parent=5 // pred_check
        _
      $region22: #{tpu_custom_call.1} parent=5 // pred_check_branch
        %111 = sbr.rel (%p108) target = $region24
      $region23: #{tpu_custom_call.1} parent=5 // pred_region
        %s112 = ssub.s32 %s13, 1
        %s113 = sand.u32 %s26, 1
        %s114 = scalar_lea.sflag [#allocation3], %s113
        %s115 = sand.u32 %s26, 1
        %s116 = smul.addr %s115, 8192
        %s117 = scalar_lea.vmem [#allocation2], %s116
        // Predicated region
        $region25: #{tpu_custom_call.1} parent=23 // pred_check
          %p118 = pneg %p39
        $region26: #{tpu_custom_call.1} parent=23 // pred_check_branch
          %120 = sbr.rel (%p118) target = $region28
        $region27: #{tpu_custom_call.1} parent=23 // pred_region
          %121 = dma.done %s114, 131072
        $region28: #{tpu_custom_call.1} parent=23 // pred_fallthru
          _
        %s122 = sand.u32 %s26, 1
        %s123 = scalar_lea.sflag [#allocation3], %s122
        %s124 = sand.u32 %s26, 1
        %s125 = smul.addr %s124, 8192
        %s126 = scalar_lea.vmem [#allocation2], %s125
        %p127 = pneg %p39
        %p128 = pneg %p36
        %p129 = pneg %p65
        %p130 = pneg %p62
        %s131 = sand.u32 %s52, 1
        %s132 = scalar_lea.sflag [#allocation4], %s131
        %s133 = sand.u32 %s52, 1
        %s134 = smul.addr %s133, 8192
        %s135 = scalar_lea.vmem [#allocation5], %s134
        %s136 = smul.u32 64, %s18
        %s137 = smul.u32 64, %s18
        %v138 = vld [vmem:[%s117] sm:$0xff]
        %v139 = vld [vmem:[%s117 + $0x8] sm:$0xff]
        %v140 = vld [vmem:[%s117 + $0x10] sm:$0xff]
        %v141 = vld [vmem:[%s117 + $0x18] sm:$0xff]
        %v142 = vld [vmem:[%s117 + $0x20] sm:$0xff]
        %v143 = vld [vmem:[%s117 + $0x28] sm:$0xff]
        %v144 = vld [vmem:[%s117 + $0x30] sm:$0xff]
        %v145 = vld [vmem:[%s117 + $0x38] sm:$0xff]
        %v146 = vld [vmem:[%s117 + $0x40] sm:$0xff]
        %v147 = vld [vmem:[%s117 + $0x48] sm:$0xff]
        %v148 = vld [vmem:[%s117 + $0x50] sm:$0xff]
        %v149 = vld [vmem:[%s117 + $0x58] sm:$0xff]
        %v150 = vld [vmem:[%s117 + $0x60] sm:$0xff]
        %v151 = vld [vmem:[%s117 + $0x68] sm:$0xff]
        %v152 = vld [vmem:[%s117 + $0x70] sm:$0xff]
        %v153 = vld [vmem:[%s117 + $0x78] sm:$0xff]
        %v154 = vld [vmem:[%s117 + $0x80] sm:$0xff]
        %v155 = vld [vmem:[%s117 + $0x88] sm:$0xff]
        %v156 = vld [vmem:[%s117 + $0x90] sm:$0xff]
        %v157 = vld [vmem:[%s117 + $0x98] sm:$0xff]
        %v158 = vld [vmem:[%s117 + $0xa0] sm:$0xff]
        %v159 = vld [vmem:[%s117 + $0xa8] sm:$0xff]
        %v160 = vld [vmem:[%s117 + $0xb0] sm:$0xff]
        %v161 = vld [vmem:[%s117 + $0xb8] sm:$0xff]
        %v162 = vld [vmem:[%s117 + $0xc0] sm:$0xff]
        %v163 = vld [vmem:[%s117 + $0xc8] sm:$0xff]
        %v164 = vld [vmem:[%s117 + $0xd0] sm:$0xff]
        %v165 = vld [vmem:[%s117 + $0xd8] sm:$0xff]
        %v166 = vld [vmem:[%s117 + $0xe0] sm:$0xff]
        %v167 = vld [vmem:[%s117 + $0xe8] sm:$0xff]
        %v168 = vld [vmem:[%s117 + $0xf0] sm:$0xff]
        %v169 = vld [vmem:[%s117 + $0xf8] sm:$0xff]
        %v170 = vld [vmem:[%s117 + $0x100] sm:$0xff]
        %v171 = vld [vmem:[%s117 + $0x108] sm:$0xff]
        %v172 = vld [vmem:[%s117 + $0x110] sm:$0xff]
        %v173 = vld [vmem:[%s117 + $0x118] sm:$0xff]
        %v174 = vld [vmem:[%s117 + $0x120] sm:$0xff]
        %v175 = vld [vmem:[%s117 + $0x128] sm:$0xff]
        %v176 = vld [vmem:[%s117 + $0x130] sm:$0xff]
        %v177 = vld [vmem:[%s117 + $0x138] sm:$0xff]
        %v178 = vld [vmem:[%s117 + $0x140] sm:$0xff]
        %v179 = vld [vmem:[%s117 + $0x148] sm:$0xff]
        %v180 = vld [vmem:[%s117 + $0x150] sm:$0xff]
        %v181 = vld [vmem:[%s117 + $0x158] sm:$0xff]
        %v182 = vld [vmem:[%s117 + $0x160] sm:$0xff]
        %v183 = vld [vmem:[%s117 + $0x168] sm:$0xff]
        %v184 = vld [vmem:[%s117 + $0x170] sm:$0xff]
        %v185 = vld [vmem:[%s117 + $0x178] sm:$0xff]
        %v186 = vld [vmem:[%s117 + $0x180] sm:$0xff]
        %v187 = vld [vmem:[%s117 + $0x188] sm:$0xff]
        %v188 = vld [vmem:[%s117 + $0x190] sm:$0xff]
        %v189 = vld [vmem:[%s117 + $0x198] sm:$0xff]
        %v190 = vld [vmem:[%s117 + $0x1a0] sm:$0xff]
        %v191 = vld [vmem:[%s117 + $0x1a8] sm:$0xff]
        %v192 = vld [vmem:[%s117 + $0x1b0] sm:$0xff]
        %v193 = vld [vmem:[%s117 + $0x1b8] sm:$0xff]
        %v194 = vld [vmem:[%s117 + $0x1c0] sm:$0xff]
        %v195 = vld [vmem:[%s117 + $0x1c8] sm:$0xff]
        %v196 = vld [vmem:[%s117 + $0x1d0] sm:$0xff]
        %v197 = vld [vmem:[%s117 + $0x1d8] sm:$0xff]
        %v198 = vld [vmem:[%s117 + $0x1e0] sm:$0xff]
        %v199 = vld [vmem:[%s117 + $0x1e8] sm:$0xff]
        %v200 = vld [vmem:[%s117 + $0x1f0] sm:$0xff]
        %v201 = vld [vmem:[%s117 + $0x1f8] sm:$0xff]
        %v202 = vld [vmem:[%s117 + $0x200] sm:$0xff]
        %v203 = vld [vmem:[%s117 + $0x208] sm:$0xff]
        %v204 = vld [vmem:[%s117 + $0x210] sm:$0xff]
        %v205 = vld [vmem:[%s117 + $0x218] sm:$0xff]
        %v206 = vld [vmem:[%s117 + $0x220] sm:$0xff]
        %v207 = vld [vmem:[%s117 + $0x228] sm:$0xff]
        %v208 = vld [vmem:[%s117 + $0x230] sm:$0xff]
        %v209 = vld [vmem:[%s117 + $0x238] sm:$0xff]
        %v210 = vld [vmem:[%s117 + $0x240] sm:$0xff]
        %v211 = vld [vmem:[%s117 + $0x248] sm:$0xff]
        %v212 = vld [vmem:[%s117 + $0x250] sm:$0xff]
        %v213 = vld [vmem:[%s117 + $0x258] sm:$0xff]
        %v214 = vld [vmem:[%s117 + $0x260] sm:$0xff]
        %v215 = vld [vmem:[%s117 + $0x268] sm:$0xff]
        %v216 = vld [vmem:[%s117 + $0x270] sm:$0xff]
        %v217 = vld [vmem:[%s117 + $0x278] sm:$0xff]
        %v218 = vld [vmem:[%s117 + $0x280] sm:$0xff]
        %v219 = vld [vmem:[%s117 + $0x288] sm:$0xff]
        %v220 = vld [vmem:[%s117 + $0x290] sm:$0xff]
        %v221 = vld [vmem:[%s117 + $0x298] sm:$0xff]
        %v222 = vld [vmem:[%s117 + $0x2a0] sm:$0xff]
        %v223 = vld [vmem:[%s117 + $0x2a8] sm:$0xff]
        %v224 = vld [vmem:[%s117 + $0x2b0] sm:$0xff]
        %v225 = vld [vmem:[%s117 + $0x2b8] sm:$0xff]
        %v226 = vld [vmem:[%s117 + $0x2c0] sm:$0xff]
        %v227 = vld [vmem:[%s117 + $0x2c8] sm:$0xff]
        %v228 = vld [vmem:[%s117 + $0x2d0] sm:$0xff]
        %v229 = vld [vmem:[%s117 + $0x2d8] sm:$0xff]
        %v230 = vld [vmem:[%s117 + $0x2e0] sm:$0xff]
        %v231 = vld [vmem:[%s117 + $0x2e8] sm:$0xff]
        %v232 = vld [vmem:[%s117 + $0x2f0] sm:$0xff]
        %v233 = vld [vmem:[%s117 + $0x2f8] sm:$0xff]
        %v234 = vld [vmem:[%s117 + $0x300] sm:$0xff]
        %v235 = vld [vmem:[%s117 + $0x308] sm:$0xff]
        %v236 = vld [vmem:[%s117 + $0x310] sm:$0xff]
        %v237 = vld [vmem:[%s117 + $0x318] sm:$0xff]
        %v238 = vld [vmem:[%s117 + $0x320] sm:$0xff]
        %v239 = vld [vmem:[%s117 + $0x328] sm:$0xff]
        %v240 = vld [vmem:[%s117 + $0x330] sm:$0xff]
        %v241 = vld [vmem:[%s117 + $0x338] sm:$0xff]
        %v242 = vld [vmem:[%s117 + $0x340] sm:$0xff]
        %v243 = vld [vmem:[%s117 + $0x348] sm:$0xff]
        %v244 = vld [vmem:[%s117 + $0x350] sm:$0xff]
        %v245 = vld [vmem:[%s117 + $0x358] sm:$0xff]
        %v246 = vld [vmem:[%s117 + $0x360] sm:$0xff]
        %v247 = vld [vmem:[%s117 + $0x368] sm:$0xff]
        %v248 = vld [vmem:[%s117 + $0x370] sm:$0xff]
        %v249 = vld [vmem:[%s117 + $0x378] sm:$0xff]
        %v250 = vld [vmem:[%s117 + $0x380] sm:$0xff]
        %v251 = vld [vmem:[%s117 + $0x388] sm:$0xff]
        %v252 = vld [vmem:[%s117 + $0x390] sm:$0xff]
        %v253 = vld [vmem:[%s117 + $0x398] sm:$0xff]
        %v254 = vld [vmem:[%s117 + $0x3a0] sm:$0xff]
        %v255 = vld [vmem:[%s117 + $0x3a8] sm:$0xff]
        %v256 = vld [vmem:[%s117 + $0x3b0] sm:$0xff]
        %v257 = vld [vmem:[%s117 + $0x3b8] sm:$0xff]
        %v258 = vld [vmem:[%s117 + $0x3c0] sm:$0xff]
        %v259 = vld [vmem:[%s117 + $0x3c8] sm:$0xff]
        %v260 = vld [vmem:[%s117 + $0x3d0] sm:$0xff]
        %v261 = vld [vmem:[%s117 + $0x3d8] sm:$0xff]
        %v262 = vld [vmem:[%s117 + $0x3e0] sm:$0xff]
        %v263 = vld [vmem:[%s117 + $0x3e8] sm:$0xff]
        %v264 = vld [vmem:[%s117 + $0x3f0] sm:$0xff]
        %v265 = vld [vmem:[%s117 + $0x3f8] sm:$0xff]
        %v266 = vld [vmem:[%s117 + $0x400] sm:$0xff]
        %v267 = vld [vmem:[%s117 + $0x408] sm:$0xff]
        %v268 = vld [vmem:[%s117 + $0x410] sm:$0xff]
        %v269 = vld [vmem:[%s117 + $0x418] sm:$0xff]
        %v270 = vld [vmem:[%s117 + $0x420] sm:$0xff]
        %v271 = vld [vmem:[%s117 + $0x428] sm:$0xff]
        %v272 = vld [vmem:[%s117 + $0x430] sm:$0xff]
        %v273 = vld [vmem:[%s117 + $0x438] sm:$0xff]
        %v274 = vld [vmem:[%s117 + $0x440] sm:$0xff]
        %v275 = vld [vmem:[%s117 + $0x448] sm:$0xff]
        %v276 = vld [vmem:[%s117 + $0x450] sm:$0xff]
        %v277 = vld [vmem:[%s117 + $0x458] sm:$0xff]
        %v278 = vld [vmem:[%s117 + $0x460] sm:$0xff]
        %v279 = vld [vmem:[%s117 + $0x468] sm:$0xff]
        %v280 = vld [vmem:[%s117 + $0x470] sm:$0xff]
        %v281 = vld [vmem:[%s117 + $0x478] sm:$0xff]
        %v282 = vld [vmem:[%s117 + $0x480] sm:$0xff]
        %v283 = vld [vmem:[%s117 + $0x488] sm:$0xff]
        %v284 = vld [vmem:[%s117 + $0x490] sm:$0xff]
        %v285 = vld [vmem:[%s117 + $0x498] sm:$0xff]
        %v286 = vld [vmem:[%s117 + $0x4a0] sm:$0xff]
        %v287 = vld [vmem:[%s117 + $0x4a8] sm:$0xff]
        %v288 = vld [vmem:[%s117 + $0x4b0] sm:$0xff]
        %v289 = vld [vmem:[%s117 + $0x4b8] sm:$0xff]
        %v290 = vld [vmem:[%s117 + $0x4c0] sm:$0xff]
        %v291 = vld [vmem:[%s117 + $0x4c8] sm:$0xff]
        %v292 = vld [vmem:[%s117 + $0x4d0] sm:$0xff]
        %v293 = vld [vmem:[%s117 + $0x4d8] sm:$0xff]
        %v294 = vld [vmem:[%s117 + $0x4e0] sm:$0xff]
        %v295 = vld [vmem:[%s117 + $0x4e8] sm:$0xff]
        %v296 = vld [vmem:[%s117 + $0x4f0] sm:$0xff]
        %v297 = vld [vmem:[%s117 + $0x4f8] sm:$0xff]
        %v298 = vld [vmem:[%s117 + $0x500] sm:$0xff]
        %v299 = vld [vmem:[%s117 + $0x508] sm:$0xff]
        %v300 = vld [vmem:[%s117 + $0x510] sm:$0xff]
        %v301 = vld [vmem:[%s117 + $0x518] sm:$0xff]
        %v302 = vld [vmem:[%s117 + $0x520] sm:$0xff]
        %v303 = vld [vmem:[%s117 + $0x528] sm:$0xff]
        %v304 = vld [vmem:[%s117 + $0x530] sm:$0xff]
        %v305 = vld [vmem:[%s117 + $0x538] sm:$0xff]
        %v306 = vld [vmem:[%s117 + $0x540] sm:$0xff]
        %v307 = vld [vmem:[%s117 + $0x548] sm:$0xff]
        %v308 = vld [vmem:[%s117 + $0x550] sm:$0xff]
        %v309 = vld [vmem:[%s117 + $0x558] sm:$0xff]
        %v310 = vld [vmem:[%s117 + $0x560] sm:$0xff]
        %v311 = vld [vmem:[%s117 + $0x568] sm:$0xff]
        %v312 = vld [vmem:[%s117 + $0x570] sm:$0xff]
        %v313 = vld [vmem:[%s117 + $0x578] sm:$0xff]
        %v314 = vld [vmem:[%s117 + $0x580] sm:$0xff]
        %v315 = vld [vmem:[%s117 + $0x588] sm:$0xff]
        %v316 = vld [vmem:[%s117 + $0x590] sm:$0xff]
        %v317 = vld [vmem:[%s117 + $0x598] sm:$0xff]
        %v318 = vld [vmem:[%s117 + $0x5a0] sm:$0xff]
        %v319 = vld [vmem:[%s117 + $0x5a8] sm:$0xff]
        %v320 = vld [vmem:[%s117 + $0x5b0] sm:$0xff]
        %v321 = vld [vmem:[%s117 + $0x5b8] sm:$0xff]
        %v322 = vld [vmem:[%s117 + $0x5c0] sm:$0xff]
        %v323 = vld [vmem:[%s117 + $0x5c8] sm:$0xff]
        %v324 = vld [vmem:[%s117 + $0x5d0] sm:$0xff]
        %v325 = vld [vmem:[%s117 + $0x5d8] sm:$0xff]
        %v326 = vld [vmem:[%s117 + $0x5e0] sm:$0xff]
        %v327 = vld [vmem:[%s117 + $0x5e8] sm:$0xff]
        %v328 = vld [vmem:[%s117 + $0x5f0] sm:$0xff]
        %v329 = vld [vmem:[%s117 + $0x5f8] sm:$0xff]
        %v330 = vld [vmem:[%s117 + $0x600] sm:$0xff]
        %v331 = vld [vmem:[%s117 + $0x608] sm:$0xff]
        %v332 = vld [vmem:[%s117 + $0x610] sm:$0xff]
        %v333 = vld [vmem:[%s117 + $0x618] sm:$0xff]
        %v334 = vld [vmem:[%s117 + $0x620] sm:$0xff]
        %v335 = vld [vmem:[%s117 + $0x628] sm:$0xff]
        %v336 = vld [vmem:[%s117 + $0x630] sm:$0xff]
        %v337 = vld [vmem:[%s117 + $0x638] sm:$0xff]
        %v338 = vld [vmem:[%s117 + $0x640] sm:$0xff]
        %v339 = vld [vmem:[%s117 + $0x648] sm:$0xff]
        %v340 = vld [vmem:[%s117 + $0x650] sm:$0xff]
        %v341 = vld [vmem:[%s117 + $0x658] sm:$0xff]
        %v342 = vld [vmem:[%s117 + $0x660] sm:$0xff]
        %v343 = vld [vmem:[%s117 + $0x668] sm:$0xff]
        %v344 = vld [vmem:[%s117 + $0x670] sm:$0xff]
        %v345 = vld [vmem:[%s117 + $0x678] sm:$0xff]
        %v346 = vld [vmem:[%s117 + $0x680] sm:$0xff]
        %v347 = vld [vmem:[%s117 + $0x688] sm:$0xff]
        %v348 = vld [vmem:[%s117 + $0x690] sm:$0xff]
        %v349 = vld [vmem:[%s117 + $0x698] sm:$0xff]
        %v350 = vld [vmem:[%s117 + $0x6a0] sm:$0xff]
        %v351 = vld [vmem:[%s117 + $0x6a8] sm:$0xff]
        %v352 = vld [vmem:[%s117 + $0x6b0] sm:$0xff]
        %v353 = vld [vmem:[%s117 + $0x6b8] sm:$0xff]
        %v354 = vld [vmem:[%s117 + $0x6c0] sm:$0xff]
        %v355 = vld [vmem:[%s117 + $0x6c8] sm:$0xff]
        %v356 = vld [vmem:[%s117 + $0x6d0] sm:$0xff]
        %v357 = vld [vmem:[%s117 + $0x6d8] sm:$0xff]
        %v358 = vld [vmem:[%s117 + $0x6e0] sm:$0xff]
        %v359 = vld [vmem:[%s117 + $0x6e8] sm:$0xff]
        %v360 = vld [vmem:[%s117 + $0x6f0] sm:$0xff]
        %v361 = vld [vmem:[%s117 + $0x6f8] sm:$0xff]
        %v362 = vld [vmem:[%s117 + $0x700] sm:$0xff]
        %v363 = vld [vmem:[%s117 + $0x708] sm:$0xff]
        %v364 = vld [vmem:[%s117 + $0x710] sm:$0xff]
        %v365 = vld [vmem:[%s117 + $0x718] sm:$0xff]
        %v366 = vld [vmem:[%s117 + $0x720] sm:$0xff]
        %v367 = vld [vmem:[%s117 + $0x728] sm:$0xff]
        %v368 = vld [vmem:[%s117 + $0x730] sm:$0xff]
        %v369 = vld [vmem:[%s117 + $0x738] sm:$0xff]
        %v370 = vld [vmem:[%s117 + $0x740] sm:$0xff]
        %v371 = vld [vmem:[%s117 + $0x748] sm:$0xff]
        %v372 = vld [vmem:[%s117 + $0x750] sm:$0xff]
        %v373 = vld [vmem:[%s117 + $0x758] sm:$0xff]
        %v374 = vld [vmem:[%s117 + $0x760] sm:$0xff]
        %v375 = vld [vmem:[%s117 + $0x768] sm:$0xff]
        %v376 = vld [vmem:[%s117 + $0x770] sm:$0xff]
        %v377 = vld [vmem:[%s117 + $0x778] sm:$0xff]
        %v378 = vld [vmem:[%s117 + $0x780] sm:$0xff]
        %v379 = vld [vmem:[%s117 + $0x788] sm:$0xff]
        %v380 = vld [vmem:[%s117 + $0x790] sm:$0xff]
        %v381 = vld [vmem:[%s117 + $0x798] sm:$0xff]
        %v382 = vld [vmem:[%s117 + $0x7a0] sm:$0xff]
        %v383 = vld [vmem:[%s117 + $0x7a8] sm:$0xff]
        %v384 = vld [vmem:[%s117 + $0x7b0] sm:$0xff]
        %v385 = vld [vmem:[%s117 + $0x7b8] sm:$0xff]
        %v386 = vld [vmem:[%s117 + $0x7c0] sm:$0xff]
        %v387 = vld [vmem:[%s117 + $0x7c8] sm:$0xff]
        %v388 = vld [vmem:[%s117 + $0x7d0] sm:$0xff]
        %v389 = vld [vmem:[%s117 + $0x7d8] sm:$0xff]
        %v390 = vld [vmem:[%s117 + $0x7e0] sm:$0xff]
        %v391 = vld [vmem:[%s117 + $0x7e8] sm:$0xff]
        %v392 = vld [vmem:[%s117 + $0x7f0] sm:$0xff]
        %v393 = vld [vmem:[%s117 + $0x7f8] sm:$0xff]
        %v394 = vld [vmem:[%s117 + $0x800] sm:$0xff]
        %v395 = vld [vmem:[%s117 + $0x808] sm:$0xff]
        %v396 = vld [vmem:[%s117 + $0x810] sm:$0xff]
        %v397 = vld [vmem:[%s117 + $0x818] sm:$0xff]
        %v398 = vld [vmem:[%s117 + $0x820] sm:$0xff]
        %v399 = vld [vmem:[%s117 + $0x828] sm:$0xff]
        %v400 = vld [vmem:[%s117 + $0x830] sm:$0xff]
        %v401 = vld [vmem:[%s117 + $0x838] sm:$0xff]
        %v402 = vld [vmem:[%s117 + $0x840] sm:$0xff]
        %v403 = vld [vmem:[%s117 + $0x848] sm:$0xff]
        %v404 = vld [vmem:[%s117 + $0x850] sm:$0xff]
        %v405 = vld [vmem:[%s117 + $0x858] sm:$0xff]
        %v406 = vld [vmem:[%s117 + $0x860] sm:$0xff]
        %v407 = vld [vmem:[%s117 + $0x868] sm:$0xff]
        %v408 = vld [vmem:[%s117 + $0x870] sm:$0xff]
        %v409 = vld [vmem:[%s117 + $0x878] sm:$0xff]
        %v410 = vld [vmem:[%s117 + $0x880] sm:$0xff]
        %v411 = vld [vmem:[%s117 + $0x888] sm:$0xff]
        %v412 = vld [vmem:[%s117 + $0x890] sm:$0xff]
        %v413 = vld [vmem:[%s117 + $0x898] sm:$0xff]
        %v414 = vld [vmem:[%s117 + $0x8a0] sm:$0xff]
        %v415 = vld [vmem:[%s117 + $0x8a8] sm:$0xff]
        %v416 = vld [vmem:[%s117 + $0x8b0] sm:$0xff]
        %v417 = vld [vmem:[%s117 + $0x8b8] sm:$0xff]
        %v418 = vld [vmem:[%s117 + $0x8c0] sm:$0xff]
        %v419 = vld [vmem:[%s117 + $0x8c8] sm:$0xff]
        %v420 = vld [vmem:[%s117 + $0x8d0] sm:$0xff]
        %v421 = vld [vmem:[%s117 + $0x8d8] sm:$0xff]
        %v422 = vld [vmem:[%s117 + $0x8e0] sm:$0xff]
        %v423 = vld [vmem:[%s117 + $0x8e8] sm:$0xff]
        %v424 = vld [vmem:[%s117 + $0x8f0] sm:$0xff]
        %v425 = vld [vmem:[%s117 + $0x8f8] sm:$0xff]
        %v426 = vld [vmem:[%s117 + $0x900] sm:$0xff]
        %v427 = vld [vmem:[%s117 + $0x908] sm:$0xff]
        %v428 = vld [vmem:[%s117 + $0x910] sm:$0xff]
        %v429 = vld [vmem:[%s117 + $0x918] sm:$0xff]
        %v430 = vld [vmem:[%s117 + $0x920] sm:$0xff]
        %v431 = vld [vmem:[%s117 + $0x928] sm:$0xff]
        %v432 = vld [vmem:[%s117 + $0x930] sm:$0xff]
        %v433 = vld [vmem:[%s117 + $0x938] sm:$0xff]
        %v434 = vld [vmem:[%s117 + $0x940] sm:$0xff]
        %v435 = vld [vmem:[%s117 + $0x948] sm:$0xff]
        %v436 = vld [vmem:[%s117 + $0x950] sm:$0xff]
        %v437 = vld [vmem:[%s117 + $0x958] sm:$0xff]
        %v438 = vld [vmem:[%s117 + $0x960] sm:$0xff]
        %v439 = vld [vmem:[%s117 + $0x968] sm:$0xff]
        %v440 = vld [vmem:[%s117 + $0x970] sm:$0xff]
        %v441 = vld [vmem:[%s117 + $0x978] sm:$0xff]
        %v442 = vld [vmem:[%s117 + $0x980] sm:$0xff]
        %v443 = vld [vmem:[%s117 + $0x988] sm:$0xff]
        %v444 = vld [vmem:[%s117 + $0x990] sm:$0xff]
        %v445 = vld [vmem:[%s117 + $0x998] sm:$0xff]
        %v446 = vld [vmem:[%s117 + $0x9a0] sm:$0xff]
        %v447 = vld [vmem:[%s117 + $0x9a8] sm:$0xff]
        %v448 = vld [vmem:[%s117 + $0x9b0] sm:$0xff]
        %v449 = vld [vmem:[%s117 + $0x9b8] sm:$0xff]
        %v450 = vld [vmem:[%s117 + $0x9c0] sm:$0xff]
        %v451 = vld [vmem:[%s117 + $0x9c8] sm:$0xff]
        %v452 = vld [vmem:[%s117 + $0x9d0] sm:$0xff]
        %v453 = vld [vmem:[%s117 + $0x9d8] sm:$0xff]
        %v454 = vld [vmem:[%s117 + $0x9e0] sm:$0xff]
        %v455 = vld [vmem:[%s117 + $0x9e8] sm:$0xff]
        %v456 = vld [vmem:[%s117 + $0x9f0] sm:$0xff]
        %v457 = vld [vmem:[%s117 + $0x9f8] sm:$0xff]
        %v458 = vld [vmem:[%s117 + $0xa00] sm:$0xff]
        %v459 = vld [vmem:[%s117 + $0xa08] sm:$0xff]
        %v460 = vld [vmem:[%s117 + $0xa10] sm:$0xff]
        %v461 = vld [vmem:[%s117 + $0xa18] sm:$0xff]
        %v462 = vld [vmem:[%s117 + $0xa20] sm:$0xff]
        %v463 = vld [vmem:[%s117 + $0xa28] sm:$0xff]
        %v464 = vld [vmem:[%s117 + $0xa30] sm:$0xff]
        %v465 = vld [vmem:[%s117 + $0xa38] sm:$0xff]
        %v466 = vld [vmem:[%s117 + $0xa40] sm:$0xff]
        %v467 = vld [vmem:[%s117 + $0xa48] sm:$0xff]
        %v468 = vld [vmem:[%s117 + $0xa50] sm:$0xff]
        %v469 = vld [vmem:[%s117 + $0xa58] sm:$0xff]
        %v470 = vld [vmem:[%s117 + $0xa60] sm:$0xff]
        %v471 = vld [vmem:[%s117 + $0xa68] sm:$0xff]
        %v472 = vld [vmem:[%s117 + $0xa70] sm:$0xff]
        %v473 = vld [vmem:[%s117 + $0xa78] sm:$0xff]
        %v474 = vld [vmem:[%s117 + $0xa80] sm:$0xff]
        %v475 = vld [vmem:[%s117 + $0xa88] sm:$0xff]
        %v476 = vld [vmem:[%s117 + $0xa90] sm:$0xff]
        %v477 = vld [vmem:[%s117 + $0xa98] sm:$0xff]
        %v478 = vld [vmem:[%s117 + $0xaa0] sm:$0xff]
        %v479 = vld [vmem:[%s117 + $0xaa8] sm:$0xff]
        %v480 = vld [vmem:[%s117 + $0xab0] sm:$0xff]
        %v481 = vld [vmem:[%s117 + $0xab8] sm:$0xff]
        %v482 = vld [vmem:[%s117 + $0xac0] sm:$0xff]
        %v483 = vld [vmem:[%s117 + $0xac8] sm:$0xff]
        %v484 = vld [vmem:[%s117 + $0xad0] sm:$0xff]
        %v485 = vld [vmem:[%s117 + $0xad8] sm:$0xff]
        %v486 = vld [vmem:[%s117 + $0xae0] sm:$0xff]
        %v487 = vld [vmem:[%s117 + $0xae8] sm:$0xff]
        %v488 = vld [vmem:[%s117 + $0xaf0] sm:$0xff]
        %v489 = vld [vmem:[%s117 + $0xaf8] sm:$0xff]
        %v490 = vld [vmem:[%s117 + $0xb00] sm:$0xff]
        %v491 = vld [vmem:[%s117 + $0xb08] sm:$0xff]
        %v492 = vld [vmem:[%s117 + $0xb10] sm:$0xff]
        %v493 = vld [vmem:[%s117 + $0xb18] sm:$0xff]
        %v494 = vld [vmem:[%s117 + $0xb20] sm:$0xff]
        %v495 = vld [vmem:[%s117 + $0xb28] sm:$0xff]
        %v496 = vld [vmem:[%s117 + $0xb30] sm:$0xff]
        %v497 = vld [vmem:[%s117 + $0xb38] sm:$0xff]
        %v498 = vld [vmem:[%s117 + $0xb40] sm:$0xff]
        %v499 = vld [vmem:[%s117 + $0xb48] sm:$0xff]
        %v500 = vld [vmem:[%s117 + $0xb50] sm:$0xff]
        %v501 = vld [vmem:[%s117 + $0xb58] sm:$0xff]
        %v502 = vld [vmem:[%s117 + $0xb60] sm:$0xff]
        %v503 = vld [vmem:[%s117 + $0xb68] sm:$0xff]
        %v504 = vld [vmem:[%s117 + $0xb70] sm:$0xff]
        %v505 = vld [vmem:[%s117 + $0xb78] sm:$0xff]
        %v506 = vld [vmem:[%s117 + $0xb80] sm:$0xff]
        %v507 = vld [vmem:[%s117 + $0xb88] sm:$0xff]
        %v508 = vld [vmem:[%s117 + $0xb90] sm:$0xff]
        %v509 = vld [vmem:[%s117 + $0xb98] sm:$0xff]
        %v510 = vld [vmem:[%s117 + $0xba0] sm:$0xff]
        %v511 = vld [vmem:[%s117 + $0xba8] sm:$0xff]
        %v512 = vld [vmem:[%s117 + $0xbb0] sm:$0xff]
        %v513 = vld [vmem:[%s117 + $0xbb8] sm:$0xff]
        %v514 = vld [vmem:[%s117 + $0xbc0] sm:$0xff]
        %v515 = vld [vmem:[%s117 + $0xbc8] sm:$0xff]
        %v516 = vld [vmem:[%s117 + $0xbd0] sm:$0xff]
        %v517 = vld [vmem:[%s117 + $0xbd8] sm:$0xff]
        %v518 = vld [vmem:[%s117 + $0xbe0] sm:$0xff]
        %v519 = vld [vmem:[%s117 + $0xbe8] sm:$0xff]
        %v520 = vld [vmem:[%s117 + $0xbf0] sm:$0xff]
        %v521 = vld [vmem:[%s117 + $0xbf8] sm:$0xff]
        %v522 = vld [vmem:[%s117 + $0xc00] sm:$0xff]
        %v523 = vld [vmem:[%s117 + $0xc08] sm:$0xff]
        %v524 = vld [vmem:[%s117 + $0xc10] sm:$0xff]
        %v525 = vld [vmem:[%s117 + $0xc18] sm:$0xff]
        %v526 = vld [vmem:[%s117 + $0xc20] sm:$0xff]
        %v527 = vld [vmem:[%s117 + $0xc28] sm:$0xff]
        %v528 = vld [vmem:[%s117 + $0xc30] sm:$0xff]
        %v529 = vld [vmem:[%s117 + $0xc38] sm:$0xff]
        %v530 = vld [vmem:[%s117 + $0xc40] sm:$0xff]
        %v531 = vld [vmem:[%s117 + $0xc48] sm:$0xff]
        %v532 = vld [vmem:[%s117 + $0xc50] sm:$0xff]
        %v533 = vld [vmem:[%s117 + $0xc58] sm:$0xff]
        %v534 = vld [vmem:[%s117 + $0xc60] sm:$0xff]
        %v535 = vld [vmem:[%s117 + $0xc68] sm:$0xff]
        %v536 = vld [vmem:[%s117 + $0xc70] sm:$0xff]
        %v537 = vld [vmem:[%s117 + $0xc78] sm:$0xff]
        %v538 = vld [vmem:[%s117 + $0xc80] sm:$0xff]
        %v539 = vld [vmem:[%s117 + $0xc88] sm:$0xff]
        %v540 = vld [vmem:[%s117 + $0xc90] sm:$0xff]
        %v541 = vld [vmem:[%s117 + $0xc98] sm:$0xff]
        %v542 = vld [vmem:[%s117 + $0xca0] sm:$0xff]
        %v543 = vld [vmem:[%s117 + $0xca8] sm:$0xff]
        %v544 = vld [vmem:[%s117 + $0xcb0] sm:$0xff]
        %v545 = vld [vmem:[%s117 + $0xcb8] sm:$0xff]
        %v546 = vld [vmem:[%s117 + $0xcc0] sm:$0xff]
        %v547 = vld [vmem:[%s117 + $0xcc8] sm:$0xff]
        %v548 = vld [vmem:[%s117 + $0xcd0] sm:$0xff]
        %v549 = vld [vmem:[%s117 + $0xcd8] sm:$0xff]
        %v550 = vld [vmem:[%s117 + $0xce0] sm:$0xff]
        %v551 = vld [vmem:[%s117 + $0xce8] sm:$0xff]
        %v552 = vld [vmem:[%s117 + $0xcf0] sm:$0xff]
        %v553 = vld [vmem:[%s117 + $0xcf8] sm:$0xff]
        %v554 = vld [vmem:[%s117 + $0xd00] sm:$0xff]
        %v555 = vld [vmem:[%s117 + $0xd08] sm:$0xff]
        %v556 = vld [vmem:[%s117 + $0xd10] sm:$0xff]
        %v557 = vld [vmem:[%s117 + $0xd18] sm:$0xff]
        %v558 = vld [vmem:[%s117 + $0xd20] sm:$0xff]
        %v559 = vld [vmem:[%s117 + $0xd28] sm:$0xff]
        %v560 = vld [vmem:[%s117 + $0xd30] sm:$0xff]
        %v561 = vld [vmem:[%s117 + $0xd38] sm:$0xff]
        %v562 = vld [vmem:[%s117 + $0xd40] sm:$0xff]
        %v563 = vld [vmem:[%s117 + $0xd48] sm:$0xff]
        %v564 = vld [vmem:[%s117 + $0xd50] sm:$0xff]
        %v565 = vld [vmem:[%s117 + $0xd58] sm:$0xff]
        %v566 = vld [vmem:[%s117 + $0xd60] sm:$0xff]
        %v567 = vld [vmem:[%s117 + $0xd68] sm:$0xff]
        %v568 = vld [vmem:[%s117 + $0xd70] sm:$0xff]
        %v569 = vld [vmem:[%s117 + $0xd78] sm:$0xff]
        %v570 = vld [vmem:[%s117 + $0xd80] sm:$0xff]
        %v571 = vld [vmem:[%s117 + $0xd88] sm:$0xff]
        %v572 = vld [vmem:[%s117 + $0xd90] sm:$0xff]
        %v573 = vld [vmem:[%s117 + $0xd98] sm:$0xff]
        %v574 = vld [vmem:[%s117 + $0xda0] sm:$0xff]
        %v575 = vld [vmem:[%s117 + $0xda8] sm:$0xff]
        %v576 = vld [vmem:[%s117 + $0xdb0] sm:$0xff]
        %v577 = vld [vmem:[%s117 + $0xdb8] sm:$0xff]
        %v578 = vld [vmem:[%s117 + $0xdc0] sm:$0xff]
        %v579 = vld [vmem:[%s117 + $0xdc8] sm:$0xff]
        %v580 = vld [vmem:[%s117 + $0xdd0] sm:$0xff]
        %v581 = vld [vmem:[%s117 + $0xdd8] sm:$0xff]
        %v582 = vld [vmem:[%s117 + $0xde0] sm:$0xff]
        %v583 = vld [vmem:[%s117 + $0xde8] sm:$0xff]
        %v584 = vld [vmem:[%s117 + $0xdf0] sm:$0xff]
        %v585 = vld [vmem:[%s117 + $0xdf8] sm:$0xff]
        %v586 = vld [vmem:[%s117 + $0xe00] sm:$0xff]
        %v587 = vld [vmem:[%s117 + $0xe08] sm:$0xff]
        %v588 = vld [vmem:[%s117 + $0xe10] sm:$0xff]
        %v589 = vld [vmem:[%s117 + $0xe18] sm:$0xff]
        %v590 = vld [vmem:[%s117 + $0xe20] sm:$0xff]
        %v591 = vld [vmem:[%s117 + $0xe28] sm:$0xff]
        %v592 = vld [vmem:[%s117 + $0xe30] sm:$0xff]
        %v593 = vld [vmem:[%s117 + $0xe38] sm:$0xff]
        %v594 = vld [vmem:[%s117 + $0xe40] sm:$0xff]
        %v595 = vld [vmem:[%s117 + $0xe48] sm:$0xff]
        %v596 = vld [vmem:[%s117 + $0xe50] sm:$0xff]
        %v597 = vld [vmem:[%s117 + $0xe58] sm:$0xff]
        %v598 = vld [vmem:[%s117 + $0xe60] sm:$0xff]
        %v599 = vld [vmem:[%s117 + $0xe68] sm:$0xff]
        %v600 = vld [vmem:[%s117 + $0xe70] sm:$0xff]
        %v601 = vld [vmem:[%s117 + $0xe78] sm:$0xff]
        %v602 = vld [vmem:[%s117 + $0xe80] sm:$0xff]
        %v603 = vld [vmem:[%s117 + $0xe88] sm:$0xff]
        %v604 = vld [vmem:[%s117 + $0xe90] sm:$0xff]
        %v605 = vld [vmem:[%s117 + $0xe98] sm:$0xff]
        %v606 = vld [vmem:[%s117 + $0xea0] sm:$0xff]
        %v607 = vld [vmem:[%s117 + $0xea8] sm:$0xff]
        %v608 = vld [vmem:[%s117 + $0xeb0] sm:$0xff]
        %v609 = vld [vmem:[%s117 + $0xeb8] sm:$0xff]
        %v610 = vld [vmem:[%s117 + $0xec0] sm:$0xff]
        %v611 = vld [vmem:[%s117 + $0xec8] sm:$0xff]
        %v612 = vld [vmem:[%s117 + $0xed0] sm:$0xff]
        %v613 = vld [vmem:[%s117 + $0xed8] sm:$0xff]
        %v614 = vld [vmem:[%s117 + $0xee0] sm:$0xff]
        %v615 = vld [vmem:[%s117 + $0xee8] sm:$0xff]
        %v616 = vld [vmem:[%s117 + $0xef0] sm:$0xff]
        %v617 = vld [vmem:[%s117 + $0xef8] sm:$0xff]
        %v618 = vld [vmem:[%s117 + $0xf00] sm:$0xff]
        %v619 = vld [vmem:[%s117 + $0xf08] sm:$0xff]
        %v620 = vld [vmem:[%s117 + $0xf10] sm:$0xff]
        %v621 = vld [vmem:[%s117 + $0xf18] sm:$0xff]
        %v622 = vld [vmem:[%s117 + $0xf20] sm:$0xff]
        %v623 = vld [vmem:[%s117 + $0xf28] sm:$0xff]
        %v624 = vld [vmem:[%s117 + $0xf30] sm:$0xff]
        %v625 = vld [vmem:[%s117 + $0xf38] sm:$0xff]
        %v626 = vld [vmem:[%s117 + $0xf40] sm:$0xff]
        %v627 = vld [vmem:[%s117 + $0xf48] sm:$0xff]
        %v628 = vld [vmem:[%s117 + $0xf50] sm:$0xff]
        %v629 = vld [vmem:[%s117 + $0xf58] sm:$0xff]
        %v630 = vld [vmem:[%s117 + $0xf60] sm:$0xff]
        %v631 = vld [vmem:[%s117 + $0xf68] sm:$0xff]
        %v632 = vld [vmem:[%s117 + $0xf70] sm:$0xff]
        %v633 = vld [vmem:[%s117 + $0xf78] sm:$0xff]
        %v634 = vld [vmem:[%s117 + $0xf80] sm:$0xff]
        %v635 = vld [vmem:[%s117 + $0xf88] sm:$0xff]
        %v636 = vld [vmem:[%s117 + $0xf90] sm:$0xff]
        %v637 = vld [vmem:[%s117 + $0xf98] sm:$0xff]
        %v638 = vld [vmem:[%s117 + $0xfa0] sm:$0xff]
        %v639 = vld [vmem:[%s117 + $0xfa8] sm:$0xff]
        %v640 = vld [vmem:[%s117 + $0xfb0] sm:$0xff]
        %v641 = vld [vmem:[%s117 + $0xfb8] sm:$0xff]
        %v642 = vld [vmem:[%s117 + $0xfc0] sm:$0xff]
        %v643 = vld [vmem:[%s117 + $0xfc8] sm:$0xff]
        %v644 = vld [vmem:[%s117 + $0xfd0] sm:$0xff]
        %v645 = vld [vmem:[%s117 + $0xfd8] sm:$0xff]
        %v646 = vld [vmem:[%s117 + $0xfe0] sm:$0xff]
        %v647 = vld [vmem:[%s117 + $0xfe8] sm:$0xff]
        %v648 = vld [vmem:[%s117 + $0xff0] sm:$0xff]
        %v649 = vld [vmem:[%s117 + $0xff8] sm:$0xff]
        %v650 = vld [vmem:[%s117 + $0x1000] sm:$0xff]
        %v651 = vld [vmem:[%s117 + $0x1008] sm:$0xff]
        %v652 = vld [vmem:[%s117 + $0x1010] sm:$0xff]
        %v653 = vld [vmem:[%s117 + $0x1018] sm:$0xff]
        %v654 = vld [vmem:[%s117 + $0x1020] sm:$0xff]
        %v655 = vld [vmem:[%s117 + $0x1028] sm:$0xff]
        %v656 = vld [vmem:[%s117 + $0x1030] sm:$0xff]
        %v657 = vld [vmem:[%s117 + $0x1038] sm:$0xff]
        %v658 = vld [vmem:[%s117 + $0x1040] sm:$0xff]
        %v659 = vld [vmem:[%s117 + $0x1048] sm:$0xff]
        %v660 = vld [vmem:[%s117 + $0x1050] sm:$0xff]
        %v661 = vld [vmem:[%s117 + $0x1058] sm:$0xff]
        %v662 = vld [vmem:[%s117 + $0x1060] sm:$0xff]
        %v663 = vld [vmem:[%s117 + $0x1068] sm:$0xff]
        %v664 = vld [vmem:[%s117 + $0x1070] sm:$0xff]
        %v665 = vld [vmem:[%s117 + $0x1078] sm:$0xff]
        %v666 = vld [vmem:[%s117 + $0x1080] sm:$0xff]
        %v667 = vld [vmem:[%s117 + $0x1088] sm:$0xff]
        %v668 = vld [vmem:[%s117 + $0x1090] sm:$0xff]
        %v669 = vld [vmem:[%s117 + $0x1098] sm:$0xff]
        %v670 = vld [vmem:[%s117 + $0x10a0] sm:$0xff]
        %v671 = vld [vmem:[%s117 + $0x10a8] sm:$0xff]
        %v672 = vld [vmem:[%s117 + $0x10b0] sm:$0xff]
        %v673 = vld [vmem:[%s117 + $0x10b8] sm:$0xff]
        %v674 = vld [vmem:[%s117 + $0x10c0] sm:$0xff]
        %v675 = vld [vmem:[%s117 + $0x10c8] sm:$0xff]
        %v676 = vld [vmem:[%s117 + $0x10d0] sm:$0xff]
        %v677 = vld [vmem:[%s117 + $0x10d8] sm:$0xff]
        %v678 = vld [vmem:[%s117 + $0x10e0] sm:$0xff]
        %v679 = vld [vmem:[%s117 + $0x10e8] sm:$0xff]
        %v680 = vld [vmem:[%s117 + $0x10f0] sm:$0xff]
        %v681 = vld [vmem:[%s117 + $0x10f8] sm:$0xff]
        %v682 = vld [vmem:[%s117 + $0x1100] sm:$0xff]
        %v683 = vld [vmem:[%s117 + $0x1108] sm:$0xff]
        %v684 = vld [vmem:[%s117 + $0x1110] sm:$0xff]
        %v685 = vld [vmem:[%s117 + $0x1118] sm:$0xff]
        %v686 = vld [vmem:[%s117 + $0x1120] sm:$0xff]
        %v687 = vld [vmem:[%s117 + $0x1128] sm:$0xff]
        %v688 = vld [vmem:[%s117 + $0x1130] sm:$0xff]
        %v689 = vld [vmem:[%s117 + $0x1138] sm:$0xff]
        %v690 = vld [vmem:[%s117 + $0x1140] sm:$0xff]
        %v691 = vld [vmem:[%s117 + $0x1148] sm:$0xff]
        %v692 = vld [vmem:[%s117 + $0x1150] sm:$0xff]
        %v693 = vld [vmem:[%s117 + $0x1158] sm:$0xff]
        %v694 = vld [vmem:[%s117 + $0x1160] sm:$0xff]
        %v695 = vld [vmem:[%s117 + $0x1168] sm:$0xff]
        %v696 = vld [vmem:[%s117 + $0x1170] sm:$0xff]
        %v697 = vld [vmem:[%s117 + $0x1178] sm:$0xff]
        %v698 = vld [vmem:[%s117 + $0x1180] sm:$0xff]
        %v699 = vld [vmem:[%s117 + $0x1188] sm:$0xff]
        %v700 = vld [vmem:[%s117 + $0x1190] sm:$0xff]
        %v701 = vld [vmem:[%s117 + $0x1198] sm:$0xff]
        %v702 = vld [vmem:[%s117 + $0x11a0] sm:$0xff]
        %v703 = vld [vmem:[%s117 + $0x11a8] sm:$0xff]
        %v704 = vld [vmem:[%s117 + $0x11b0] sm:$0xff]
        %v705 = vld [vmem:[%s117 + $0x11b8] sm:$0xff]
        %v706 = vld [vmem:[%s117 + $0x11c0] sm:$0xff]
        %v707 = vld [vmem:[%s117 + $0x11c8] sm:$0xff]
        %v708 = vld [vmem:[%s117 + $0x11d0] sm:$0xff]
        %v709 = vld [vmem:[%s117 + $0x11d8] sm:$0xff]
        %v710 = vld [vmem:[%s117 + $0x11e0] sm:$0xff]
        %v711 = vld [vmem:[%s117 + $0x11e8] sm:$0xff]
        %v712 = vld [vmem:[%s117 + $0x11f0] sm:$0xff]
        %v713 = vld [vmem:[%s117 + $0x11f8] sm:$0xff]
        %v714 = vld [vmem:[%s117 + $0x1200] sm:$0xff]
        %v715 = vld [vmem:[%s117 + $0x1208] sm:$0xff]
        %v716 = vld [vmem:[%s117 + $0x1210] sm:$0xff]
        %v717 = vld [vmem:[%s117 + $0x1218] sm:$0xff]
        %v718 = vld [vmem:[%s117 + $0x1220] sm:$0xff]
        %v719 = vld [vmem:[%s117 + $0x1228] sm:$0xff]
        %v720 = vld [vmem:[%s117 + $0x1230] sm:$0xff]
        %v721 = vld [vmem:[%s117 + $0x1238] sm:$0xff]
        %v722 = vld [vmem:[%s117 + $0x1240] sm:$0xff]
        %v723 = vld [vmem:[%s117 + $0x1248] sm:$0xff]
        %v724 = vld [vmem:[%s117 + $0x1250] sm:$0xff]
        %v725 = vld [vmem:[%s117 + $0x1258] sm:$0xff]
        %v726 = vld [vmem:[%s117 + $0x1260] sm:$0xff]
        %v727 = vld [vmem:[%s117 + $0x1268] sm:$0xff]
        %v728 = vld [vmem:[%s117 + $0x1270] sm:$0xff]
        %v729 = vld [vmem:[%s117 + $0x1278] sm:$0xff]
        %v730 = vld [vmem:[%s117 + $0x1280] sm:$0xff]
        %v731 = vld [vmem:[%s117 + $0x1288] sm:$0xff]
        %v732 = vld [vmem:[%s117 + $0x1290] sm:$0xff]
        %v733 = vld [vmem:[%s117 + $0x1298] sm:$0xff]
        %v734 = vld [vmem:[%s117 + $0x12a0] sm:$0xff]
        %v735 = vld [vmem:[%s117 + $0x12a8] sm:$0xff]
        %v736 = vld [vmem:[%s117 + $0x12b0] sm:$0xff]
        %v737 = vld [vmem:[%s117 + $0x12b8] sm:$0xff]
        %v738 = vld [vmem:[%s117 + $0x12c0] sm:$0xff]
        %v739 = vld [vmem:[%s117 + $0x12c8] sm:$0xff]
        %v740 = vld [vmem:[%s117 + $0x12d0] sm:$0xff]
        %v741 = vld [vmem:[%s117 + $0x12d8] sm:$0xff]
        %v742 = vld [vmem:[%s117 + $0x12e0] sm:$0xff]
        %v743 = vld [vmem:[%s117 + $0x12e8] sm:$0xff]
        %v744 = vld [vmem:[%s117 + $0x12f0] sm:$0xff]
        %v745 = vld [vmem:[%s117 + $0x12f8] sm:$0xff]
        %v746 = vld [vmem:[%s117 + $0x1300] sm:$0xff]
        %v747 = vld [vmem:[%s117 + $0x1308] sm:$0xff]
        %v748 = vld [vmem:[%s117 + $0x1310] sm:$0xff]
        %v749 = vld [vmem:[%s117 + $0x1318] sm:$0xff]
        %v750 = vld [vmem:[%s117 + $0x1320] sm:$0xff]
        %v751 = vld [vmem:[%s117 + $0x1328] sm:$0xff]
        %v752 = vld [vmem:[%s117 + $0x1330] sm:$0xff]
        %v753 = vld [vmem:[%s117 + $0x1338] sm:$0xff]
        %v754 = vld [vmem:[%s117 + $0x1340] sm:$0xff]
        %v755 = vld [vmem:[%s117 + $0x1348] sm:$0xff]
        %v756 = vld [vmem:[%s117 + $0x1350] sm:$0xff]
        %v757 = vld [vmem:[%s117 + $0x1358] sm:$0xff]
        %v758 = vld [vmem:[%s117 + $0x1360] sm:$0xff]
        %v759 = vld [vmem:[%s117 + $0x1368] sm:$0xff]
        %v760 = vld [vmem:[%s117 + $0x1370] sm:$0xff]
        %v761 = vld [vmem:[%s117 + $0x1378] sm:$0xff]
        %v762 = vld [vmem:[%s117 + $0x1380] sm:$0xff]
        %v763 = vld [vmem:[%s117 + $0x1388] sm:$0xff]
        %v764 = vld [vmem:[%s117 + $0x1390] sm:$0xff]
        %v765 = vld [vmem:[%s117 + $0x1398] sm:$0xff]
        %v766 = vld [vmem:[%s117 + $0x13a0] sm:$0xff]
        %v767 = vld [vmem:[%s117 + $0x13a8] sm:$0xff]
        %v768 = vld [vmem:[%s117 + $0x13b0] sm:$0xff]
        %v769 = vld [vmem:[%s117 + $0x13b8] sm:$0xff]
        %v770 = vld [vmem:[%s117 + $0x13c0] sm:$0xff]
        %v771 = vld [vmem:[%s117 + $0x13c8] sm:$0xff]
        %v772 = vld [vmem:[%s117 + $0x13d0] sm:$0xff]
        %v773 = vld [vmem:[%s117 + $0x13d8] sm:$0xff]
        %v774 = vld [vmem:[%s117 + $0x13e0] sm:$0xff]
        %v775 = vld [vmem:[%s117 + $0x13e8] sm:$0xff]
        %v776 = vld [vmem:[%s117 + $0x13f0] sm:$0xff]
        %v777 = vld [vmem:[%s117 + $0x13f8] sm:$0xff]
        %v778 = vld [vmem:[%s117 + $0x1400] sm:$0xff]
        %v779 = vld [vmem:[%s117 + $0x1408] sm:$0xff]
        %v780 = vld [vmem:[%s117 + $0x1410] sm:$0xff]
        %v781 = vld [vmem:[%s117 + $0x1418] sm:$0xff]
        %v782 = vld [vmem:[%s117 + $0x1420] sm:$0xff]
        %v783 = vld [vmem:[%s117 + $0x1428] sm:$0xff]
        %v784 = vld [vmem:[%s117 + $0x1430] sm:$0xff]
        %v785 = vld [vmem:[%s117 + $0x1438] sm:$0xff]
        %v786 = vld [vmem:[%s117 + $0x1440] sm:$0xff]
        %v787 = vld [vmem:[%s117 + $0x1448] sm:$0xff]
        %v788 = vld [vmem:[%s117 + $0x1450] sm:$0xff]
        %v789 = vld [vmem:[%s117 + $0x1458] sm:$0xff]
        %v790 = vld [vmem:[%s117 + $0x1460] sm:$0xff]
        %v791 = vld [vmem:[%s117 + $0x1468] sm:$0xff]
        %v792 = vld [vmem:[%s117 + $0x1470] sm:$0xff]
        %v793 = vld [vmem:[%s117 + $0x1478] sm:$0xff]
        %v794 = vld [vmem:[%s117 + $0x1480] sm:$0xff]
        %v795 = vld [vmem:[%s117 + $0x1488] sm:$0xff]
        %v796 = vld [vmem:[%s117 + $0x1490] sm:$0xff]
        %v797 = vld [vmem:[%s117 + $0x1498] sm:$0xff]
        %v798 = vld [vmem:[%s117 + $0x14a0] sm:$0xff]
        %v799 = vld [vmem:[%s117 + $0x14a8] sm:$0xff]
        %v800 = vld [vmem:[%s117 + $0x14b0] sm:$0xff]
        %v801 = vld [vmem:[%s117 + $0x14b8] sm:$0xff]
        %v802 = vld [vmem:[%s117 + $0x14c0] sm:$0xff]
        %v803 = vld [vmem:[%s117 + $0x14c8] sm:$0xff]
        %v804 = vld [vmem:[%s117 + $0x14d0] sm:$0xff]
        %v805 = vld [vmem:[%s117 + $0x14d8] sm:$0xff]
        %v806 = vld [vmem:[%s117 + $0x14e0] sm:$0xff]
        %v807 = vld [vmem:[%s117 + $0x14e8] sm:$0xff]
        %v808 = vld [vmem:[%s117 + $0x14f0] sm:$0xff]
        %v809 = vld [vmem:[%s117 + $0x14f8] sm:$0xff]
        %v810 = vld [vmem:[%s117 + $0x1500] sm:$0xff]
        %v811 = vld [vmem:[%s117 + $0x1508] sm:$0xff]
        %v812 = vld [vmem:[%s117 + $0x1510] sm:$0xff]
        %v813 = vld [vmem:[%s117 + $0x1518] sm:$0xff]
        %v814 = vld [vmem:[%s117 + $0x1520] sm:$0xff]
        %v815 = vld [vmem:[%s117 + $0x1528] sm:$0xff]
        %v816 = vld [vmem:[%s117 + $0x1530] sm:$0xff]
        %v817 = vld [vmem:[%s117 + $0x1538] sm:$0xff]
        %v818 = vld [vmem:[%s117 + $0x1540] sm:$0xff]
        %v819 = vld [vmem:[%s117 + $0x1548] sm:$0xff]
        %v820 = vld [vmem:[%s117 + $0x1550] sm:$0xff]
        %v821 = vld [vmem:[%s117 + $0x1558] sm:$0xff]
        %v822 = vld [vmem:[%s117 + $0x1560] sm:$0xff]
        %v823 = vld [vmem:[%s117 + $0x1568] sm:$0xff]
        %v824 = vld [vmem:[%s117 + $0x1570] sm:$0xff]
        %v825 = vld [vmem:[%s117 + $0x1578] sm:$0xff]
        %v826 = vld [vmem:[%s117 + $0x1580] sm:$0xff]
        %v827 = vld [vmem:[%s117 + $0x1588] sm:$0xff]
        %v828 = vld [vmem:[%s117 + $0x1590] sm:$0xff]
        %v829 = vld [vmem:[%s117 + $0x1598] sm:$0xff]
        %v830 = vld [vmem:[%s117 + $0x15a0] sm:$0xff]
        %v831 = vld [vmem:[%s117 + $0x15a8] sm:$0xff]
        %v832 = vld [vmem:[%s117 + $0x15b0] sm:$0xff]
        %v833 = vld [vmem:[%s117 + $0x15b8] sm:$0xff]
        %v834 = vld [vmem:[%s117 + $0x15c0] sm:$0xff]
        %v835 = vld [vmem:[%s117 + $0x15c8] sm:$0xff]
        %v836 = vld [vmem:[%s117 + $0x15d0] sm:$0xff]
        %v837 = vld [vmem:[%s117 + $0x15d8] sm:$0xff]
        %v838 = vld [vmem:[%s117 + $0x15e0] sm:$0xff]
        %v839 = vld [vmem:[%s117 + $0x15e8] sm:$0xff]
        %v840 = vld [vmem:[%s117 + $0x15f0] sm:$0xff]
        %v841 = vld [vmem:[%s117 + $0x15f8] sm:$0xff]
        %v842 = vld [vmem:[%s117 + $0x1600] sm:$0xff]
        %v843 = vld [vmem:[%s117 + $0x1608] sm:$0xff]
        %v844 = vld [vmem:[%s117 + $0x1610] sm:$0xff]
        %v845 = vld [vmem:[%s117 + $0x1618] sm:$0xff]
        %v846 = vld [vmem:[%s117 + $0x1620] sm:$0xff]
        %v847 = vld [vmem:[%s117 + $0x1628] sm:$0xff]
        %v848 = vld [vmem:[%s117 + $0x1630] sm:$0xff]
        %v849 = vld [vmem:[%s117 + $0x1638] sm:$0xff]
        %v850 = vld [vmem:[%s117 + $0x1640] sm:$0xff]
        %v851 = vld [vmem:[%s117 + $0x1648] sm:$0xff]
        %v852 = vld [vmem:[%s117 + $0x1650] sm:$0xff]
        %v853 = vld [vmem:[%s117 + $0x1658] sm:$0xff]
        %v854 = vld [vmem:[%s117 + $0x1660] sm:$0xff]
        %v855 = vld [vmem:[%s117 + $0x1668] sm:$0xff]
        %v856 = vld [vmem:[%s117 + $0x1670] sm:$0xff]
        %v857 = vld [vmem:[%s117 + $0x1678] sm:$0xff]
        %v858 = vld [vmem:[%s117 + $0x1680] sm:$0xff]
        %v859 = vld [vmem:[%s117 + $0x1688] sm:$0xff]
        %v860 = vld [vmem:[%s117 + $0x1690] sm:$0xff]
        %v861 = vld [vmem:[%s117 + $0x1698] sm:$0xff]
        %v862 = vld [vmem:[%s117 + $0x16a0] sm:$0xff]
        %v863 = vld [vmem:[%s117 + $0x16a8] sm:$0xff]
        %v864 = vld [vmem:[%s117 + $0x16b0] sm:$0xff]
        %v865 = vld [vmem:[%s117 + $0x16b8] sm:$0xff]
        %v866 = vld [vmem:[%s117 + $0x16c0] sm:$0xff]
        %v867 = vld [vmem:[%s117 + $0x16c8] sm:$0xff]
        %v868 = vld [vmem:[%s117 + $0x16d0] sm:$0xff]
        %v869 = vld [vmem:[%s117 + $0x16d8] sm:$0xff]
        %v870 = vld [vmem:[%s117 + $0x16e0] sm:$0xff]
        %v871 = vld [vmem:[%s117 + $0x16e8] sm:$0xff]
        %v872 = vld [vmem:[%s117 + $0x16f0] sm:$0xff]
        %v873 = vld [vmem:[%s117 + $0x16f8] sm:$0xff]
        %v874 = vld [vmem:[%s117 + $0x1700] sm:$0xff]
        %v875 = vld [vmem:[%s117 + $0x1708] sm:$0xff]
        %v876 = vld [vmem:[%s117 + $0x1710] sm:$0xff]
        %v877 = vld [vmem:[%s117 + $0x1718] sm:$0xff]
        %v878 = vld [vmem:[%s117 + $0x1720] sm:$0xff]
        %v879 = vld [vmem:[%s117 + $0x1728] sm:$0xff]
        %v880 = vld [vmem:[%s117 + $0x1730] sm:$0xff]
        %v881 = vld [vmem:[%s117 + $0x1738] sm:$0xff]
        %v882 = vld [vmem:[%s117 + $0x1740] sm:$0xff]
        %v883 = vld [vmem:[%s117 + $0x1748] sm:$0xff]
        %v884 = vld [vmem:[%s117 + $0x1750] sm:$0xff]
        %v885 = vld [vmem:[%s117 + $0x1758] sm:$0xff]
        %v886 = vld [vmem:[%s117 + $0x1760] sm:$0xff]
        %v887 = vld [vmem:[%s117 + $0x1768] sm:$0xff]
        %v888 = vld [vmem:[%s117 + $0x1770] sm:$0xff]
        %v889 = vld [vmem:[%s117 + $0x1778] sm:$0xff]
        %v890 = vld [vmem:[%s117 + $0x1780] sm:$0xff]
        %v891 = vld [vmem:[%s117 + $0x1788] sm:$0xff]
        %v892 = vld [vmem:[%s117 + $0x1790] sm:$0xff]
        %v893 = vld [vmem:[%s117 + $0x1798] sm:$0xff]
        %v894 = vld [vmem:[%s117 + $0x17a0] sm:$0xff]
        %v895 = vld [vmem:[%s117 + $0x17a8] sm:$0xff]
        %v896 = vld [vmem:[%s117 + $0x17b0] sm:$0xff]
        %v897 = vld [vmem:[%s117 + $0x17b8] sm:$0xff]
        %v898 = vld [vmem:[%s117 + $0x17c0] sm:$0xff]
        %v899 = vld [vmem:[%s117 + $0x17c8] sm:$0xff]
        %v900 = vld [vmem:[%s117 + $0x17d0] sm:$0xff]
        %v901 = vld [vmem:[%s117 + $0x17d8] sm:$0xff]
        %v902 = vld [vmem:[%s117 + $0x17e0] sm:$0xff]
        %v903 = vld [vmem:[%s117 + $0x17e8] sm:$0xff]
        %v904 = vld [vmem:[%s117 + $0x17f0] sm:$0xff]
        %v905 = vld [vmem:[%s117 + $0x17f8] sm:$0xff]
        %v906 = vld [vmem:[%s117 + $0x1800] sm:$0xff]
        %v907 = vld [vmem:[%s117 + $0x1808] sm:$0xff]
        %v908 = vld [vmem:[%s117 + $0x1810] sm:$0xff]
        %v909 = vld [vmem:[%s117 + $0x1818] sm:$0xff]
        %v910 = vld [vmem:[%s117 + $0x1820] sm:$0xff]
        %v911 = vld [vmem:[%s117 + $0x1828] sm:$0xff]
        %v912 = vld [vmem:[%s117 + $0x1830] sm:$0xff]
        %v913 = vld [vmem:[%s117 + $0x1838] sm:$0xff]
        %v914 = vld [vmem:[%s117 + $0x1840] sm:$0xff]
        %v915 = vld [vmem:[%s117 + $0x1848] sm:$0xff]
        %v916 = vld [vmem:[%s117 + $0x1850] sm:$0xff]
        %v917 = vld [vmem:[%s117 + $0x1858] sm:$0xff]
        %v918 = vld [vmem:[%s117 + $0x1860] sm:$0xff]
        %v919 = vld [vmem:[%s117 + $0x1868] sm:$0xff]
        %v920 = vld [vmem:[%s117 + $0x1870] sm:$0xff]
        %v921 = vld [vmem:[%s117 + $0x1878] sm:$0xff]
        %v922 = vld [vmem:[%s117 + $0x1880] sm:$0xff]
        %v923 = vld [vmem:[%s117 + $0x1888] sm:$0xff]
        %v924 = vld [vmem:[%s117 + $0x1890] sm:$0xff]
        %v925 = vld [vmem:[%s117 + $0x1898] sm:$0xff]
        %v926 = vld [vmem:[%s117 + $0x18a0] sm:$0xff]
        %v927 = vld [vmem:[%s117 + $0x18a8] sm:$0xff]
        %v928 = vld [vmem:[%s117 + $0x18b0] sm:$0xff]
        %v929 = vld [vmem:[%s117 + $0x18b8] sm:$0xff]
        %v930 = vld [vmem:[%s117 + $0x18c0] sm:$0xff]
        %v931 = vld [vmem:[%s117 + $0x18c8] sm:$0xff]
        %v932 = vld [vmem:[%s117 + $0x18d0] sm:$0xff]
        %v933 = vld [vmem:[%s117 + $0x18d8] sm:$0xff]
        %v934 = vld [vmem:[%s117 + $0x18e0] sm:$0xff]
        %v935 = vld [vmem:[%s117 + $0x18e8] sm:$0xff]
        %v936 = vld [vmem:[%s117 + $0x18f0] sm:$0xff]
        %v937 = vld [vmem:[%s117 + $0x18f8] sm:$0xff]
        %v938 = vld [vmem:[%s117 + $0x1900] sm:$0xff]
        %v939 = vld [vmem:[%s117 + $0x1908] sm:$0xff]
        %v940 = vld [vmem:[%s117 + $0x1910] sm:$0xff]
        %v941 = vld [vmem:[%s117 + $0x1918] sm:$0xff]
        %v942 = vld [vmem:[%s117 + $0x1920] sm:$0xff]
        %v943 = vld [vmem:[%s117 + $0x1928] sm:$0xff]
        %v944 = vld [vmem:[%s117 + $0x1930] sm:$0xff]
        %v945 = vld [vmem:[%s117 + $0x1938] sm:$0xff]
        %v946 = vld [vmem:[%s117 + $0x1940] sm:$0xff]
        %v947 = vld [vmem:[%s117 + $0x1948] sm:$0xff]
        %v948 = vld [vmem:[%s117 + $0x1950] sm:$0xff]
        %v949 = vld [vmem:[%s117 + $0x1958] sm:$0xff]
        %v950 = vld [vmem:[%s117 + $0x1960] sm:$0xff]
        %v951 = vld [vmem:[%s117 + $0x1968] sm:$0xff]
        %v952 = vld [vmem:[%s117 + $0x1970] sm:$0xff]
        %v953 = vld [vmem:[%s117 + $0x1978] sm:$0xff]
        %v954 = vld [vmem:[%s117 + $0x1980] sm:$0xff]
        %v955 = vld [vmem:[%s117 + $0x1988] sm:$0xff]
        %v956 = vld [vmem:[%s117 + $0x1990] sm:$0xff]
        %v957 = vld [vmem:[%s117 + $0x1998] sm:$0xff]
        %v958 = vld [vmem:[%s117 + $0x19a0] sm:$0xff]
        %v959 = vld [vmem:[%s117 + $0x19a8] sm:$0xff]
        %v960 = vld [vmem:[%s117 + $0x19b0] sm:$0xff]
        %v961 = vld [vmem:[%s117 + $0x19b8] sm:$0xff]
        %v962 = vld [vmem:[%s117 + $0x19c0] sm:$0xff]
        %v963 = vld [vmem:[%s117 + $0x19c8] sm:$0xff]
        %v964 = vld [vmem:[%s117 + $0x19d0] sm:$0xff]
        %v965 = vld [vmem:[%s117 + $0x19d8] sm:$0xff]
        %v966 = vld [vmem:[%s117 + $0x19e0] sm:$0xff]
        %v967 = vld [vmem:[%s117 + $0x19e8] sm:$0xff]
        %v968 = vld [vmem:[%s117 + $0x19f0] sm:$0xff]
        %v969 = vld [vmem:[%s117 + $0x19f8] sm:$0xff]
        %v970 = vld [vmem:[%s117 + $0x1a00] sm:$0xff]
        %v971 = vld [vmem:[%s117 + $0x1a08] sm:$0xff]
        %v972 = vld [vmem:[%s117 + $0x1a10] sm:$0xff]
        %v973 = vld [vmem:[%s117 + $0x1a18] sm:$0xff]
        %v974 = vld [vmem:[%s117 + $0x1a20] sm:$0xff]
        %v975 = vld [vmem:[%s117 + $0x1a28] sm:$0xff]
        %v976 = vld [vmem:[%s117 + $0x1a30] sm:$0xff]
        %v977 = vld [vmem:[%s117 + $0x1a38] sm:$0xff]
        %v978 = vld [vmem:[%s117 + $0x1a40] sm:$0xff]
        %v979 = vld [vmem:[%s117 + $0x1a48] sm:$0xff]
        %v980 = vld [vmem:[%s117 + $0x1a50] sm:$0xff]
        %v981 = vld [vmem:[%s117 + $0x1a58] sm:$0xff]
        %v982 = vld [vmem:[%s117 + $0x1a60] sm:$0xff]
        %v983 = vld [vmem:[%s117 + $0x1a68] sm:$0xff]
        %v984 = vld [vmem:[%s117 + $0x1a70] sm:$0xff]
        %v985 = vld [vmem:[%s117 + $0x1a78] sm:$0xff]
        %v986 = vld [vmem:[%s117 + $0x1a80] sm:$0xff]
        %v987 = vld [vmem:[%s117 + $0x1a88] sm:$0xff]
        %v988 = vld [vmem:[%s117 + $0x1a90] sm:$0xff]
        %v989 = vld [vmem:[%s117 + $0x1a98] sm:$0xff]
        %v990 = vld [vmem:[%s117 + $0x1aa0] sm:$0xff]
        %v991 = vld [vmem:[%s117 + $0x1aa8] sm:$0xff]
        %v992 = vld [vmem:[%s117 + $0x1ab0] sm:$0xff]
        %v993 = vld [vmem:[%s117 + $0x1ab8] sm:$0xff]
        %v994 = vld [vmem:[%s117 + $0x1ac0] sm:$0xff]
        %v995 = vld [vmem:[%s117 + $0x1ac8] sm:$0xff]
        %v996 = vld [vmem:[%s117 + $0x1ad0] sm:$0xff]
        %v997 = vld [vmem:[%s117 + $0x1ad8] sm:$0xff]
        %v998 = vld [vmem:[%s117 + $0x1ae0] sm:$0xff]
        %v999 = vld [vmem:[%s117 + $0x1ae8] sm:$0xff]
        %v1000 = vld [vmem:[%s117 + $0x1af0] sm:$0xff]
        %v1001 = vld [vmem:[%s117 + $0x1af8] sm:$0xff]
        %v1002 = vld [vmem:[%s117 + $0x1b00] sm:$0xff]
        %v1003 = vld [vmem:[%s117 + $0x1b08] sm:$0xff]
        %v1004 = vld [vmem:[%s117 + $0x1b10] sm:$0xff]
        %v1005 = vld [vmem:[%s117 + $0x1b18] sm:$0xff]
        %v1006 = vld [vmem:[%s117 + $0x1b20] sm:$0xff]
        %v1007 = vld [vmem:[%s117 + $0x1b28] sm:$0xff]
        %v1008 = vld [vmem:[%s117 + $0x1b30] sm:$0xff]
        %v1009 = vld [vmem:[%s117 + $0x1b38] sm:$0xff]
        %v1010 = vld [vmem:[%s117 + $0x1b40] sm:$0xff]
        %v1011 = vld [vmem:[%s117 + $0x1b48] sm:$0xff]
        %v1012 = vld [vmem:[%s117 + $0x1b50] sm:$0xff]
        %v1013 = vld [vmem:[%s117 + $0x1b58] sm:$0xff]
        %v1014 = vld [vmem:[%s117 + $0x1b60] sm:$0xff]
        %v1015 = vld [vmem:[%s117 + $0x1b68] sm:$0xff]
        %v1016 = vld [vmem:[%s117 + $0x1b70] sm:$0xff]
        %v1017 = vld [vmem:[%s117 + $0x1b78] sm:$0xff]
        %v1018 = vld [vmem:[%s117 + $0x1b80] sm:$0xff]
        %v1019 = vld [vmem:[%s117 + $0x1b88] sm:$0xff]
        %v1020 = vld [vmem:[%s117 + $0x1b90] sm:$0xff]
        %v1021 = vld [vmem:[%s117 + $0x1b98] sm:$0xff]
        %v1022 = vld [vmem:[%s117 + $0x1ba0] sm:$0xff]
        %v1023 = vld [vmem:[%s117 + $0x1ba8] sm:$0xff]
        %v1024 = vld [vmem:[%s117 + $0x1bb0] sm:$0xff]
        %v1025 = vld [vmem:[%s117 + $0x1bb8] sm:$0xff]
        %v1026 = vld [vmem:[%s117 + $0x1bc0] sm:$0xff]
        %v1027 = vld [vmem:[%s117 + $0x1bc8] sm:$0xff]
        %v1028 = vld [vmem:[%s117 + $0x1bd0] sm:$0xff]
        %v1029 = vld [vmem:[%s117 + $0x1bd8] sm:$0xff]
        %v1030 = vld [vmem:[%s117 + $0x1be0] sm:$0xff]
        %v1031 = vld [vmem:[%s117 + $0x1be8] sm:$0xff]
        %v1032 = vld [vmem:[%s117 + $0x1bf0] sm:$0xff]
        %v1033 = vld [vmem:[%s117 + $0x1bf8] sm:$0xff]
        %v1034 = vld [vmem:[%s117 + $0x1c00] sm:$0xff]
        %v1035 = vld [vmem:[%s117 + $0x1c08] sm:$0xff]
        %v1036 = vld [vmem:[%s117 + $0x1c10] sm:$0xff]
        %v1037 = vld [vmem:[%s117 + $0x1c18] sm:$0xff]
        %v1038 = vld [vmem:[%s117 + $0x1c20] sm:$0xff]
        %v1039 = vld [vmem:[%s117 + $0x1c28] sm:$0xff]
        %v1040 = vld [vmem:[%s117 + $0x1c30] sm:$0xff]
        %v1041 = vld [vmem:[%s117 + $0x1c38] sm:$0xff]
        %v1042 = vld [vmem:[%s117 + $0x1c40] sm:$0xff]
        %v1043 = vld [vmem:[%s117 + $0x1c48] sm:$0xff]
        %v1044 = vld [vmem:[%s117 + $0x1c50] sm:$0xff]
        %v1045 = vld [vmem:[%s117 + $0x1c58] sm:$0xff]
        %v1046 = vld [vmem:[%s117 + $0x1c60] sm:$0xff]
        %v1047 = vld [vmem:[%s117 + $0x1c68] sm:$0xff]
        %v1048 = vld [vmem:[%s117 + $0x1c70] sm:$0xff]
        %v1049 = vld [vmem:[%s117 + $0x1c78] sm:$0xff]
        %v1050 = vld [vmem:[%s117 + $0x1c80] sm:$0xff]
        %v1051 = vld [vmem:[%s117 + $0x1c88] sm:$0xff]
        %v1052 = vld [vmem:[%s117 + $0x1c90] sm:$0xff]
        %v1053 = vld [vmem:[%s117 + $0x1c98] sm:$0xff]
        %v1054 = vld [vmem:[%s117 + $0x1ca0] sm:$0xff]
        %v1055 = vld [vmem:[%s117 + $0x1ca8] sm:$0xff]
        %v1056 = vld [vmem:[%s117 + $0x1cb0] sm:$0xff]
        %v1057 = vld [vmem:[%s117 + $0x1cb8] sm:$0xff]
        %v1058 = vld [vmem:[%s117 + $0x1cc0] sm:$0xff]
        %v1059 = vld [vmem:[%s117 + $0x1cc8] sm:$0xff]
        %v1060 = vld [vmem:[%s117 + $0x1cd0] sm:$0xff]
        %v1061 = vld [vmem:[%s117 + $0x1cd8] sm:$0xff]
        %v1062 = vld [vmem:[%s117 + $0x1ce0] sm:$0xff]
        %v1063 = vld [vmem:[%s117 + $0x1ce8] sm:$0xff]
        %v1064 = vld [vmem:[%s117 + $0x1cf0] sm:$0xff]
        %v1065 = vld [vmem:[%s117 + $0x1cf8] sm:$0xff]
        %v1066 = vld [vmem:[%s117 + $0x1d00] sm:$0xff]
        %v1067 = vld [vmem:[%s117 + $0x1d08] sm:$0xff]
        %v1068 = vld [vmem:[%s117 + $0x1d10] sm:$0xff]
        %v1069 = vld [vmem:[%s117 + $0x1d18] sm:$0xff]
        %v1070 = vld [vmem:[%s117 + $0x1d20] sm:$0xff]
        %v1071 = vld [vmem:[%s117 + $0x1d28] sm:$0xff]
        %v1072 = vld [vmem:[%s117 + $0x1d30] sm:$0xff]
        %v1073 = vld [vmem:[%s117 + $0x1d38] sm:$0xff]
        %v1074 = vld [vmem:[%s117 + $0x1d40] sm:$0xff]
        %v1075 = vld [vmem:[%s117 + $0x1d48] sm:$0xff]
        %v1076 = vld [vmem:[%s117 + $0x1d50] sm:$0xff]
        %v1077 = vld [vmem:[%s117 + $0x1d58] sm:$0xff]
        %v1078 = vld [vmem:[%s117 + $0x1d60] sm:$0xff]
        %v1079 = vld [vmem:[%s117 + $0x1d68] sm:$0xff]
        %v1080 = vld [vmem:[%s117 + $0x1d70] sm:$0xff]
        %v1081 = vld [vmem:[%s117 + $0x1d78] sm:$0xff]
        %v1082 = vld [vmem:[%s117 + $0x1d80] sm:$0xff]
        %v1083 = vld [vmem:[%s117 + $0x1d88] sm:$0xff]
        %v1084 = vld [vmem:[%s117 + $0x1d90] sm:$0xff]
        %v1085 = vld [vmem:[%s117 + $0x1d98] sm:$0xff]
        %v1086 = vld [vmem:[%s117 + $0x1da0] sm:$0xff]
        %v1087 = vld [vmem:[%s117 + $0x1da8] sm:$0xff]
        %v1088 = vld [vmem:[%s117 + $0x1db0] sm:$0xff]
        %v1089 = vld [vmem:[%s117 + $0x1db8] sm:$0xff]
        %v1090 = vld [vmem:[%s117 + $0x1dc0] sm:$0xff]
        %v1091 = vld [vmem:[%s117 + $0x1dc8] sm:$0xff]
        %v1092 = vld [vmem:[%s117 + $0x1dd0] sm:$0xff]
        %v1093 = vld [vmem:[%s117 + $0x1dd8] sm:$0xff]
        %v1094 = vld [vmem:[%s117 + $0x1de0] sm:$0xff]
        %v1095 = vld [vmem:[%s117 + $0x1de8] sm:$0xff]
        %v1096 = vld [vmem:[%s117 + $0x1df0] sm:$0xff]
        %v1097 = vld [vmem:[%s117 + $0x1df8] sm:$0xff]
        %v1098 = vld [vmem:[%s117 + $0x1e00] sm:$0xff]
        %v1099 = vld [vmem:[%s117 + $0x1e08] sm:$0xff]
        %v1100 = vld [vmem:[%s117 + $0x1e10] sm:$0xff]
        %v1101 = vld [vmem:[%s117 + $0x1e18] sm:$0xff]
        %v1102 = vld [vmem:[%s117 + $0x1e20] sm:$0xff]
        %v1103 = vld [vmem:[%s117 + $0x1e28] sm:$0xff]
        %v1104 = vld [vmem:[%s117 + $0x1e30] sm:$0xff]
        %v1105 = vld [vmem:[%s117 + $0x1e38] sm:$0xff]
        %v1106 = vld [vmem:[%s117 + $0x1e40] sm:$0xff]
        %v1107 = vld [vmem:[%s117 + $0x1e48] sm:$0xff]
        %v1108 = vld [vmem:[%s117 + $0x1e50] sm:$0xff]
        %v1109 = vld [vmem:[%s117 + $0x1e58] sm:$0xff]
        %v1110 = vld [vmem:[%s117 + $0x1e60] sm:$0xff]
        %v1111 = vld [vmem:[%s117 + $0x1e68] sm:$0xff]
        %v1112 = vld [vmem:[%s117 + $0x1e70] sm:$0xff]
        %v1113 = vld [vmem:[%s117 + $0x1e78] sm:$0xff]
        %v1114 = vld [vmem:[%s117 + $0x1e80] sm:$0xff]
        %v1115 = vld [vmem:[%s117 + $0x1e88] sm:$0xff]
        %v1116 = vld [vmem:[%s117 + $0x1e90] sm:$0xff]
        %v1117 = vld [vmem:[%s117 + $0x1e98] sm:$0xff]
        %v1118 = vld [vmem:[%s117 + $0x1ea0] sm:$0xff]
        %v1119 = vld [vmem:[%s117 + $0x1ea8] sm:$0xff]
        %v1120 = vld [vmem:[%s117 + $0x1eb0] sm:$0xff]
        %v1121 = vld [vmem:[%s117 + $0x1eb8] sm:$0xff]
        %v1122 = vld [vmem:[%s117 + $0x1ec0] sm:$0xff]
        %v1123 = vld [vmem:[%s117 + $0x1ec8] sm:$0xff]
        %v1124 = vld [vmem:[%s117 + $0x1ed0] sm:$0xff]
        %v1125 = vld [vmem:[%s117 + $0x1ed8] sm:$0xff]
        %v1126 = vld [vmem:[%s117 + $0x1ee0] sm:$0xff]
        %v1127 = vld [vmem:[%s117 + $0x1ee8] sm:$0xff]
        %v1128 = vld [vmem:[%s117 + $0x1ef0] sm:$0xff]
        %v1129 = vld [vmem:[%s117 + $0x1ef8] sm:$0xff]
        %v1130 = vld [vmem:[%s117 + $0x1f00] sm:$0xff]
        %v1131 = vld [vmem:[%s117 + $0x1f08] sm:$0xff]
        %v1132 = vld [vmem:[%s117 + $0x1f10] sm:$0xff]
        %v1133 = vld [vmem:[%s117 + $0x1f18] sm:$0xff]
        %v1134 = vld [vmem:[%s117 + $0x1f20] sm:$0xff]
        %v1135 = vld [vmem:[%s117 + $0x1f28] sm:$0xff]
        %v1136 = vld [vmem:[%s117 + $0x1f30] sm:$0xff]
        %v1137 = vld [vmem:[%s117 + $0x1f38] sm:$0xff]
        %v1138 = vld [vmem:[%s117 + $0x1f40] sm:$0xff]
        %v1139 = vld [vmem:[%s117 + $0x1f48] sm:$0xff]
        %v1140 = vld [vmem:[%s117 + $0x1f50] sm:$0xff]
        %v1141 = vld [vmem:[%s117 + $0x1f58] sm:$0xff]
        %v1142 = vld [vmem:[%s117 + $0x1f60] sm:$0xff]
        %v1143 = vld [vmem:[%s117 + $0x1f68] sm:$0xff]
        %v1144 = vld [vmem:[%s117 + $0x1f70] sm:$0xff]
        %v1145 = vld [vmem:[%s117 + $0x1f78] sm:$0xff]
        %v1146 = vld [vmem:[%s117 + $0x1f80] sm:$0xff]
        %v1147 = vld [vmem:[%s117 + $0x1f88] sm:$0xff]
        %v1148 = vld [vmem:[%s117 + $0x1f90] sm:$0xff]
        %v1149 = vld [vmem:[%s117 + $0x1f98] sm:$0xff]
        %v1150 = vld [vmem:[%s117 + $0x1fa0] sm:$0xff]
        %v1151 = vld [vmem:[%s117 + $0x1fa8] sm:$0xff]
        %v1152 = vld [vmem:[%s117 + $0x1fb0] sm:$0xff]
        %v1153 = vld [vmem:[%s117 + $0x1fb8] sm:$0xff]
        %v1154 = vld [vmem:[%s117 + $0x1fc0] sm:$0xff]
        %v1155 = vld [vmem:[%s117 + $0x1fc8] sm:$0xff]
        %v1156 = vld [vmem:[%s117 + $0x1fd0] sm:$0xff]
        %v1157 = vld [vmem:[%s117 + $0x1fd8] sm:$0xff]
        %v1158 = vld [vmem:[%s117 + $0x1fe0] sm:$0xff]
        %v1159 = vld [vmem:[%s117 + $0x1fe8] sm:$0xff]
        %v1160 = vld [vmem:[%s117 + $0x1ff0] sm:$0xff]
        %v1161 = vld [vmem:[%s117 + $0x1ff8] sm:$0xff]
        %1162 = vst [vmem:[%s135] sm:$0xff] %v138
        %1163 = vst [vmem:[%s135 + $0x8] sm:$0xff] %v139
        %1164 = vst [vmem:[%s135 + $0x10] sm:$0xff] %v140
        %1165 = vst [vmem:[%s135 + $0x18] sm:$0xff] %v141
        %1166 = vst [vmem:[%s135 + $0x20] sm:$0xff] %v142
        %1167 = vst [vmem:[%s135 + $0x28] sm:$0xff] %v143
        %1168 = vst [vmem:[%s135 + $0x30] sm:$0xff] %v144
        %1169 = vst [vmem:[%s135 + $0x38] sm:$0xff] %v145
        %1170 = vst [vmem:[%s135 + $0x40] sm:$0xff] %v146
        %1171 = vst [vmem:[%s135 + $0x48] sm:$0xff] %v147
        %1172 = vst [vmem:[%s135 + $0x50] sm:$0xff] %v148
        %1173 = vst [vmem:[%s135 + $0x58] sm:$0xff] %v149
        %1174 = vst [vmem:[%s135 + $0x60] sm:$0xff] %v150
        %1175 = vst [vmem:[%s135 + $0x68] sm:$0xff] %v151
        %1176 = vst [vmem:[%s135 + $0x70] sm:$0xff] %v152
        %1177 = vst [vmem:[%s135 + $0x78] sm:$0xff] %v153
        %1178 = vst [vmem:[%s135 + $0x80] sm:$0xff] %v154
        %1179 = vst [vmem:[%s135 + $0x88] sm:$0xff] %v155
        %1180 = vst [vmem:[%s135 + $0x90] sm:$0xff] %v156
        %1181 = vst [vmem:[%s135 + $0x98] sm:$0xff] %v157
        %1182 = vst [vmem:[%s135 + $0xa0] sm:$0xff] %v158
        %1183 = vst [vmem:[%s135 + $0xa8] sm:$0xff] %v159
        %1184 = vst [vmem:[%s135 + $0xb0] sm:$0xff] %v160
        %1185 = vst [vmem:[%s135 + $0xb8] sm:$0xff] %v161
        %1186 = vst [vmem:[%s135 + $0xc0] sm:$0xff] %v162
        %1187 = vst [vmem:[%s135 + $0xc8] sm:$0xff] %v163
        %1188 = vst [vmem:[%s135 + $0xd0] sm:$0xff] %v164
        %1189 = vst [vmem:[%s135 + $0xd8] sm:$0xff] %v165
        %1190 = vst [vmem:[%s135 + $0xe0] sm:$0xff] %v166
        %1191 = vst [vmem:[%s135 + $0xe8] sm:$0xff] %v167
        %1192 = vst [vmem:[%s135 + $0xf0] sm:$0xff] %v168
        %1193 = vst [vmem:[%s135 + $0xf8] sm:$0xff] %v169
        %1194 = vst [vmem:[%s135 + $0x100] sm:$0xff] %v170
        %1195 = vst [vmem:[%s135 + $0x108] sm:$0xff] %v171
        %1196 = vst [vmem:[%s135 + $0x110] sm:$0xff] %v172
        %1197 = vst [vmem:[%s135 + $0x118] sm:$0xff] %v173
        %1198 = vst [vmem:[%s135 + $0x120] sm:$0xff] %v174
        %1199 = vst [vmem:[%s135 + $0x128] sm:$0xff] %v175
        %1200 = vst [vmem:[%s135 + $0x130] sm:$0xff] %v176
        %1201 = vst [vmem:[%s135 + $0x138] sm:$0xff] %v177
        %1202 = vst [vmem:[%s135 + $0x140] sm:$0xff] %v178
        %1203 = vst [vmem:[%s135 + $0x148] sm:$0xff] %v179
        %1204 = vst [vmem:[%s135 + $0x150] sm:$0xff] %v180
        %1205 = vst [vmem:[%s135 + $0x158] sm:$0xff] %v181
        %1206 = vst [vmem:[%s135 + $0x160] sm:$0xff] %v182
        %1207 = vst [vmem:[%s135 + $0x168] sm:$0xff] %v183
        %1208 = vst [vmem:[%s135 + $0x170] sm:$0xff] %v184
        %1209 = vst [vmem:[%s135 + $0x178] sm:$0xff] %v185
        %1210 = vst [vmem:[%s135 + $0x180] sm:$0xff] %v186
        %1211 = vst [vmem:[%s135 + $0x188] sm:$0xff] %v187
        %1212 = vst [vmem:[%s135 + $0x190] sm:$0xff] %v188
        %1213 = vst [vmem:[%s135 + $0x198] sm:$0xff] %v189
        %1214 = vst [vmem:[%s135 + $0x1a0] sm:$0xff] %v190
        %1215 = vst [vmem:[%s135 + $0x1a8] sm:$0xff] %v191
        %1216 = vst [vmem:[%s135 + $0x1b0] sm:$0xff] %v192
        %1217 = vst [vmem:[%s135 + $0x1b8] sm:$0xff] %v193
        %1218 = vst [vmem:[%s135 + $0x1c0] sm:$0xff] %v194
        %1219 = vst [vmem:[%s135 + $0x1c8] sm:$0xff] %v195
        %1220 = vst [vmem:[%s135 + $0x1d0] sm:$0xff] %v196
        %1221 = vst [vmem:[%s135 + $0x1d8] sm:$0xff] %v197
        %1222 = vst [vmem:[%s135 + $0x1e0] sm:$0xff] %v198
        %1223 = vst [vmem:[%s135 + $0x1e8] sm:$0xff] %v199
        %1224 = vst [vmem:[%s135 + $0x1f0] sm:$0xff] %v200
        %1225 = vst [vmem:[%s135 + $0x1f8] sm:$0xff] %v201
        %1226 = vst [vmem:[%s135 + $0x200] sm:$0xff] %v202
        %1227 = vst [vmem:[%s135 + $0x208] sm:$0xff] %v203
        %1228 = vst [vmem:[%s135 + $0x210] sm:$0xff] %v204
        %1229 = vst [vmem:[%s135 + $0x218] sm:$0xff] %v205
        %1230 = vst [vmem:[%s135 + $0x220] sm:$0xff] %v206
        %1231 = vst [vmem:[%s135 + $0x228] sm:$0xff] %v207
        %1232 = vst [vmem:[%s135 + $0x230] sm:$0xff] %v208
        %1233 = vst [vmem:[%s135 + $0x238] sm:$0xff] %v209
        %1234 = vst [vmem:[%s135 + $0x240] sm:$0xff] %v210
        %1235 = vst [vmem:[%s135 + $0x248] sm:$0xff] %v211
        %1236 = vst [vmem:[%s135 + $0x250] sm:$0xff] %v212
        %1237 = vst [vmem:[%s135 + $0x258] sm:$0xff] %v213
        %1238 = vst [vmem:[%s135 + $0x260] sm:$0xff] %v214
        %1239 = vst [vmem:[%s135 + $0x268] sm:$0xff] %v215
        %1240 = vst [vmem:[%s135 + $0x270] sm:$0xff] %v216
        %1241 = vst [vmem:[%s135 + $0x278] sm:$0xff] %v217
        %1242 = vst [vmem:[%s135 + $0x280] sm:$0xff] %v218
        %1243 = vst [vmem:[%s135 + $0x288] sm:$0xff] %v219
        %1244 = vst [vmem:[%s135 + $0x290] sm:$0xff] %v220
        %1245 = vst [vmem:[%s135 + $0x298] sm:$0xff] %v221
        %1246 = vst [vmem:[%s135 + $0x2a0] sm:$0xff] %v222
        %1247 = vst [vmem:[%s135 + $0x2a8] sm:$0xff] %v223
        %1248 = vst [vmem:[%s135 + $0x2b0] sm:$0xff] %v224
        %1249 = vst [vmem:[%s135 + $0x2b8] sm:$0xff] %v225
        %1250 = vst [vmem:[%s135 + $0x2c0] sm:$0xff] %v226
        %1251 = vst [vmem:[%s135 + $0x2c8] sm:$0xff] %v227
        %1252 = vst [vmem:[%s135 + $0x2d0] sm:$0xff] %v228
        %1253 = vst [vmem:[%s135 + $0x2d8] sm:$0xff] %v229
        %1254 = vst [vmem:[%s135 + $0x2e0] sm:$0xff] %v230
        %1255 = vst [vmem:[%s135 + $0x2e8] sm:$0xff] %v231
        %1256 = vst [vmem:[%s135 + $0x2f0] sm:$0xff] %v232
        %1257 = vst [vmem:[%s135 + $0x2f8] sm:$0xff] %v233
        %1258 = vst [vmem:[%s135 + $0x300] sm:$0xff] %v234
        %1259 = vst [vmem:[%s135 + $0x308] sm:$0xff] %v235
        %1260 = vst [vmem:[%s135 + $0x310] sm:$0xff] %v236
        %1261 = vst [vmem:[%s135 + $0x318] sm:$0xff] %v237
        %1262 = vst [vmem:[%s135 + $0x320] sm:$0xff] %v238
        %1263 = vst [vmem:[%s135 + $0x328] sm:$0xff] %v239
        %1264 = vst [vmem:[%s135 + $0x330] sm:$0xff] %v240
        %1265 = vst [vmem:[%s135 + $0x338] sm:$0xff] %v241
        %1266 = vst [vmem:[%s135 + $0x340] sm:$0xff] %v242
        %1267 = vst [vmem:[%s135 + $0x348] sm:$0xff] %v243
        %1268 = vst [vmem:[%s135 + $0x350] sm:$0xff] %v244
        %1269 = vst [vmem:[%s135 + $0x358] sm:$0xff] %v245
        %1270 = vst [vmem:[%s135 + $0x360] sm:$0xff] %v246
        %1271 = vst [vmem:[%s135 + $0x368] sm:$0xff] %v247
        %1272 = vst [vmem:[%s135 + $0x370] sm:$0xff] %v248
        %1273 = vst [vmem:[%s135 + $0x378] sm:$0xff] %v249
        %1274 = vst [vmem:[%s135 + $0x380] sm:$0xff] %v250
        %1275 = vst [vmem:[%s135 + $0x388] sm:$0xff] %v251
        %1276 = vst [vmem:[%s135 + $0x390] sm:$0xff] %v252
        %1277 = vst [vmem:[%s135 + $0x398] sm:$0xff] %v253
        %1278 = vst [vmem:[%s135 + $0x3a0] sm:$0xff] %v254
        %1279 = vst [vmem:[%s135 + $0x3a8] sm:$0xff] %v255
        %1280 = vst [vmem:[%s135 + $0x3b0] sm:$0xff] %v256
        %1281 = vst [vmem:[%s135 + $0x3b8] sm:$0xff] %v257
        %1282 = vst [vmem:[%s135 + $0x3c0] sm:$0xff] %v258
        %1283 = vst [vmem:[%s135 + $0x3c8] sm:$0xff] %v259
        %1284 = vst [vmem:[%s135 + $0x3d0] sm:$0xff] %v260
        %1285 = vst [vmem:[%s135 + $0x3d8] sm:$0xff] %v261
        %1286 = vst [vmem:[%s135 + $0x3e0] sm:$0xff] %v262
        %1287 = vst [vmem:[%s135 + $0x3e8] sm:$0xff] %v263
        %1288 = vst [vmem:[%s135 + $0x3f0] sm:$0xff] %v264
        %1289 = vst [vmem:[%s135 + $0x3f8] sm:$0xff] %v265
        %1290 = vst [vmem:[%s135 + $0x400] sm:$0xff] %v266
        %1291 = vst [vmem:[%s135 + $0x408] sm:$0xff] %v267
        %1292 = vst [vmem:[%s135 + $0x410] sm:$0xff] %v268
        %1293 = vst [vmem:[%s135 + $0x418] sm:$0xff] %v269
        %1294 = vst [vmem:[%s135 + $0x420] sm:$0xff] %v270
        %1295 = vst [vmem:[%s135 + $0x428] sm:$0xff] %v271
        %1296 = vst [vmem:[%s135 + $0x430] sm:$0xff] %v272
        %1297 = vst [vmem:[%s135 + $0x438] sm:$0xff] %v273
        %1298 = vst [vmem:[%s135 + $0x440] sm:$0xff] %v274
        %1299 = vst [vmem:[%s135 + $0x448] sm:$0xff] %v275
        %1300 = vst [vmem:[%s135 + $0x450] sm:$0xff] %v276
        %1301 = vst [vmem:[%s135 + $0x458] sm:$0xff] %v277
        %1302 = vst [vmem:[%s135 + $0x460] sm:$0xff] %v278
        %1303 = vst [vmem:[%s135 + $0x468] sm:$0xff] %v279
        %1304 = vst [vmem:[%s135 + $0x470] sm:$0xff] %v280
        %1305 = vst [vmem:[%s135 + $0x478] sm:$0xff] %v281
        %1306 = vst [vmem:[%s135 + $0x480] sm:$0xff] %v282
        %1307 = vst [vmem:[%s135 + $0x488] sm:$0xff] %v283
        %1308 = vst [vmem:[%s135 + $0x490] sm:$0xff] %v284
        %1309 = vst [vmem:[%s135 + $0x498] sm:$0xff] %v285
        %1310 = vst [vmem:[%s135 + $0x4a0] sm:$0xff] %v286
        %1311 = vst [vmem:[%s135 + $0x4a8] sm:$0xff] %v287
        %1312 = vst [vmem:[%s135 + $0x4b0] sm:$0xff] %v288
        %1313 = vst [vmem:[%s135 + $0x4b8] sm:$0xff] %v289
        %1314 = vst [vmem:[%s135 + $0x4c0] sm:$0xff] %v290
        %1315 = vst [vmem:[%s135 + $0x4c8] sm:$0xff] %v291
        %1316 = vst [vmem:[%s135 + $0x4d0] sm:$0xff] %v292
        %1317 = vst [vmem:[%s135 + $0x4d8] sm:$0xff] %v293
        %1318 = vst [vmem:[%s135 + $0x4e0] sm:$0xff] %v294
        %1319 = vst [vmem:[%s135 + $0x4e8] sm:$0xff] %v295
        %1320 = vst [vmem:[%s135 + $0x4f0] sm:$0xff] %v296
        %1321 = vst [vmem:[%s135 + $0x4f8] sm:$0xff] %v297
        %1322 = vst [vmem:[%s135 + $0x500] sm:$0xff] %v298
        %1323 = vst [vmem:[%s135 + $0x508] sm:$0xff] %v299
        %1324 = vst [vmem:[%s135 + $0x510] sm:$0xff] %v300
        %1325 = vst [vmem:[%s135 + $0x518] sm:$0xff] %v301
        %1326 = vst [vmem:[%s135 + $0x520] sm:$0xff] %v302
        %1327 = vst [vmem:[%s135 + $0x528] sm:$0xff] %v303
        %1328 = vst [vmem:[%s135 + $0x530] sm:$0xff] %v304
        %1329 = vst [vmem:[%s135 + $0x538] sm:$0xff] %v305
        %1330 = vst [vmem:[%s135 + $0x540] sm:$0xff] %v306
        %1331 = vst [vmem:[%s135 + $0x548] sm:$0xff] %v307
        %1332 = vst [vmem:[%s135 + $0x550] sm:$0xff] %v308
        %1333 = vst [vmem:[%s135 + $0x558] sm:$0xff] %v309
        %1334 = vst [vmem:[%s135 + $0x560] sm:$0xff] %v310
        %1335 = vst [vmem:[%s135 + $0x568] sm:$0xff] %v311
        %1336 = vst [vmem:[%s135 + $0x570] sm:$0xff] %v312
        %1337 = vst [vmem:[%s135 + $0x578] sm:$0xff] %v313
        %1338 = vst [vmem:[%s135 + $0x580] sm:$0xff] %v314
        %1339 = vst [vmem:[%s135 + $0x588] sm:$0xff] %v315
        %1340 = vst [vmem:[%s135 + $0x590] sm:$0xff] %v316
        %1341 = vst [vmem:[%s135 + $0x598] sm:$0xff] %v317
        %1342 = vst [vmem:[%s135 + $0x5a0] sm:$0xff] %v318
        %1343 = vst [vmem:[%s135 + $0x5a8] sm:$0xff] %v319
        %1344 = vst [vmem:[%s135 + $0x5b0] sm:$0xff] %v320
        %1345 = vst [vmem:[%s135 + $0x5b8] sm:$0xff] %v321
        %1346 = vst [vmem:[%s135 + $0x5c0] sm:$0xff] %v322
        %1347 = vst [vmem:[%s135 + $0x5c8] sm:$0xff] %v323
        %1348 = vst [vmem:[%s135 + $0x5d0] sm:$0xff] %v324
        %1349 = vst [vmem:[%s135 + $0x5d8] sm:$0xff] %v325
        %1350 = vst [vmem:[%s135 + $0x5e0] sm:$0xff] %v326
        %1351 = vst [vmem:[%s135 + $0x5e8] sm:$0xff] %v327
        %1352 = vst [vmem:[%s135 + $0x5f0] sm:$0xff] %v328
        %1353 = vst [vmem:[%s135 + $0x5f8] sm:$0xff] %v329
        %1354 = vst [vmem:[%s135 + $0x600] sm:$0xff] %v330
        %1355 = vst [vmem:[%s135 + $0x608] sm:$0xff] %v331
        %1356 = vst [vmem:[%s135 + $0x610] sm:$0xff] %v332
        %1357 = vst [vmem:[%s135 + $0x618] sm:$0xff] %v333
        %1358 = vst [vmem:[%s135 + $0x620] sm:$0xff] %v334
        %1359 = vst [vmem:[%s135 + $0x628] sm:$0xff] %v335
        %1360 = vst [vmem:[%s135 + $0x630] sm:$0xff] %v336
        %1361 = vst [vmem:[%s135 + $0x638] sm:$0xff] %v337
        %1362 = vst [vmem:[%s135 + $0x640] sm:$0xff] %v338
        %1363 = vst [vmem:[%s135 + $0x648] sm:$0xff] %v339
        %1364 = vst [vmem:[%s135 + $0x650] sm:$0xff] %v340
        %1365 = vst [vmem:[%s135 + $0x658] sm:$0xff] %v341
        %1366 = vst [vmem:[%s135 + $0x660] sm:$0xff] %v342
        %1367 = vst [vmem:[%s135 + $0x668] sm:$0xff] %v343
        %1368 = vst [vmem:[%s135 + $0x670] sm:$0xff] %v344
        %1369 = vst [vmem:[%s135 + $0x678] sm:$0xff] %v345
        %1370 = vst [vmem:[%s135 + $0x680] sm:$0xff] %v346
        %1371 = vst [vmem:[%s135 + $0x688] sm:$0xff] %v347
        %1372 = vst [vmem:[%s135 + $0x690] sm:$0xff] %v348
        %1373 = vst [vmem:[%s135 + $0x698] sm:$0xff] %v349
        %1374 = vst [vmem:[%s135 + $0x6a0] sm:$0xff] %v350
        %1375 = vst [vmem:[%s135 + $0x6a8] sm:$0xff] %v351
        %1376 = vst [vmem:[%s135 + $0x6b0] sm:$0xff] %v352
        %1377 = vst [vmem:[%s135 + $0x6b8] sm:$0xff] %v353
        %1378 = vst [vmem:[%s135 + $0x6c0] sm:$0xff] %v354
        %1379 = vst [vmem:[%s135 + $0x6c8] sm:$0xff] %v355
        %1380 = vst [vmem:[%s135 + $0x6d0] sm:$0xff] %v356
        %1381 = vst [vmem:[%s135 + $0x6d8] sm:$0xff] %v357
        %1382 = vst [vmem:[%s135 + $0x6e0] sm:$0xff] %v358
        %1383 = vst [vmem:[%s135 + $0x6e8] sm:$0xff] %v359
        %1384 = vst [vmem:[%s135 + $0x6f0] sm:$0xff] %v360
        %1385 = vst [vmem:[%s135 + $0x6f8] sm:$0xff] %v361
        %1386 = vst [vmem:[%s135 + $0x700] sm:$0xff] %v362
        %1387 = vst [vmem:[%s135 + $0x708] sm:$0xff] %v363
        %1388 = vst [vmem:[%s135 + $0x710] sm:$0xff] %v364
        %1389 = vst [vmem:[%s135 + $0x718] sm:$0xff] %v365
        %1390 = vst [vmem:[%s135 + $0x720] sm:$0xff] %v366
        %1391 = vst [vmem:[%s135 + $0x728] sm:$0xff] %v367
        %1392 = vst [vmem:[%s135 + $0x730] sm:$0xff] %v368
        %1393 = vst [vmem:[%s135 + $0x738] sm:$0xff] %v369
        %1394 = vst [vmem:[%s135 + $0x740] sm:$0xff] %v370
        %1395 = vst [vmem:[%s135 + $0x748] sm:$0xff] %v371
        %1396 = vst [vmem:[%s135 + $0x750] sm:$0xff] %v372
        %1397 = vst [vmem:[%s135 + $0x758] sm:$0xff] %v373
        %1398 = vst [vmem:[%s135 + $0x760] sm:$0xff] %v374
        %1399 = vst [vmem:[%s135 + $0x768] sm:$0xff] %v375
        %1400 = vst [vmem:[%s135 + $0x770] sm:$0xff] %v376
        %1401 = vst [vmem:[%s135 + $0x778] sm:$0xff] %v377
        %1402 = vst [vmem:[%s135 + $0x780] sm:$0xff] %v378
        %1403 = vst [vmem:[%s135 + $0x788] sm:$0xff] %v379
        %1404 = vst [vmem:[%s135 + $0x790] sm:$0xff] %v380
        %1405 = vst [vmem:[%s135 + $0x798] sm:$0xff] %v381
        %1406 = vst [vmem:[%s135 + $0x7a0] sm:$0xff] %v382
        %1407 = vst [vmem:[%s135 + $0x7a8] sm:$0xff] %v383
        %1408 = vst [vmem:[%s135 + $0x7b0] sm:$0xff] %v384
        %1409 = vst [vmem:[%s135 + $0x7b8] sm:$0xff] %v385
        %1410 = vst [vmem:[%s135 + $0x7c0] sm:$0xff] %v386
        %1411 = vst [vmem:[%s135 + $0x7c8] sm:$0xff] %v387
        %1412 = vst [vmem:[%s135 + $0x7d0] sm:$0xff] %v388
        %1413 = vst [vmem:[%s135 + $0x7d8] sm:$0xff] %v389
        %1414 = vst [vmem:[%s135 + $0x7e0] sm:$0xff] %v390
        %1415 = vst [vmem:[%s135 + $0x7e8] sm:$0xff] %v391
        %1416 = vst [vmem:[%s135 + $0x7f0] sm:$0xff] %v392
        %1417 = vst [vmem:[%s135 + $0x7f8] sm:$0xff] %v393
        %1418 = vst [vmem:[%s135 + $0x800] sm:$0xff] %v394
        %1419 = vst [vmem:[%s135 + $0x808] sm:$0xff] %v395
        %1420 = vst [vmem:[%s135 + $0x810] sm:$0xff] %v396
        %1421 = vst [vmem:[%s135 + $0x818] sm:$0xff] %v397
        %1422 = vst [vmem:[%s135 + $0x820] sm:$0xff] %v398
        %1423 = vst [vmem:[%s135 + $0x828] sm:$0xff] %v399
        %1424 = vst [vmem:[%s135 + $0x830] sm:$0xff] %v400
        %1425 = vst [vmem:[%s135 + $0x838] sm:$0xff] %v401
        %1426 = vst [vmem:[%s135 + $0x840] sm:$0xff] %v402
        %1427 = vst [vmem:[%s135 + $0x848] sm:$0xff] %v403
        %1428 = vst [vmem:[%s135 + $0x850] sm:$0xff] %v404
        %1429 = vst [vmem:[%s135 + $0x858] sm:$0xff] %v405
        %1430 = vst [vmem:[%s135 + $0x860] sm:$0xff] %v406
        %1431 = vst [vmem:[%s135 + $0x868] sm:$0xff] %v407
        %1432 = vst [vmem:[%s135 + $0x870] sm:$0xff] %v408
        %1433 = vst [vmem:[%s135 + $0x878] sm:$0xff] %v409
        %1434 = vst [vmem:[%s135 + $0x880] sm:$0xff] %v410
        %1435 = vst [vmem:[%s135 + $0x888] sm:$0xff] %v411
        %1436 = vst [vmem:[%s135 + $0x890] sm:$0xff] %v412
        %1437 = vst [vmem:[%s135 + $0x898] sm:$0xff] %v413
        %1438 = vst [vmem:[%s135 + $0x8a0] sm:$0xff] %v414
        %1439 = vst [vmem:[%s135 + $0x8a8] sm:$0xff] %v415
        %1440 = vst [vmem:[%s135 + $0x8b0] sm:$0xff] %v416
        %1441 = vst [vmem:[%s135 + $0x8b8] sm:$0xff] %v417
        %1442 = vst [vmem:[%s135 + $0x8c0] sm:$0xff] %v418
        %1443 = vst [vmem:[%s135 + $0x8c8] sm:$0xff] %v419
        %1444 = vst [vmem:[%s135 + $0x8d0] sm:$0xff] %v420
        %1445 = vst [vmem:[%s135 + $0x8d8] sm:$0xff] %v421
        %1446 = vst [vmem:[%s135 + $0x8e0] sm:$0xff] %v422
        %1447 = vst [vmem:[%s135 + $0x8e8] sm:$0xff] %v423
        %1448 = vst [vmem:[%s135 + $0x8f0] sm:$0xff] %v424
        %1449 = vst [vmem:[%s135 + $0x8f8] sm:$0xff] %v425
        %1450 = vst [vmem:[%s135 + $0x900] sm:$0xff] %v426
        %1451 = vst [vmem:[%s135 + $0x908] sm:$0xff] %v427
        %1452 = vst [vmem:[%s135 + $0x910] sm:$0xff] %v428
        %1453 = vst [vmem:[%s135 + $0x918] sm:$0xff] %v429
        %1454 = vst [vmem:[%s135 + $0x920] sm:$0xff] %v430
        %1455 = vst [vmem:[%s135 + $0x928] sm:$0xff] %v431
        %1456 = vst [vmem:[%s135 + $0x930] sm:$0xff] %v432
        %1457 = vst [vmem:[%s135 + $0x938] sm:$0xff] %v433
        %1458 = vst [vmem:[%s135 + $0x940] sm:$0xff] %v434
        %1459 = vst [vmem:[%s135 + $0x948] sm:$0xff] %v435
        %1460 = vst [vmem:[%s135 + $0x950] sm:$0xff] %v436
        %1461 = vst [vmem:[%s135 + $0x958] sm:$0xff] %v437
        %1462 = vst [vmem:[%s135 + $0x960] sm:$0xff] %v438
        %1463 = vst [vmem:[%s135 + $0x968] sm:$0xff] %v439
        %1464 = vst [vmem:[%s135 + $0x970] sm:$0xff] %v440
        %1465 = vst [vmem:[%s135 + $0x978] sm:$0xff] %v441
        %1466 = vst [vmem:[%s135 + $0x980] sm:$0xff] %v442
        %1467 = vst [vmem:[%s135 + $0x988] sm:$0xff] %v443
        %1468 = vst [vmem:[%s135 + $0x990] sm:$0xff] %v444
        %1469 = vst [vmem:[%s135 + $0x998] sm:$0xff] %v445
        %1470 = vst [vmem:[%s135 + $0x9a0] sm:$0xff] %v446
        %1471 = vst [vmem:[%s135 + $0x9a8] sm:$0xff] %v447
        %1472 = vst [vmem:[%s135 + $0x9b0] sm:$0xff] %v448
        %1473 = vst [vmem:[%s135 + $0x9b8] sm:$0xff] %v449
        %1474 = vst [vmem:[%s135 + $0x9c0] sm:$0xff] %v450
        %1475 = vst [vmem:[%s135 + $0x9c8] sm:$0xff] %v451
        %1476 = vst [vmem:[%s135 + $0x9d0] sm:$0xff] %v452
        %1477 = vst [vmem:[%s135 + $0x9d8] sm:$0xff] %v453
        %1478 = vst [vmem:[%s135 + $0x9e0] sm:$0xff] %v454
        %1479 = vst [vmem:[%s135 + $0x9e8] sm:$0xff] %v455
        %1480 = vst [vmem:[%s135 + $0x9f0] sm:$0xff] %v456
        %1481 = vst [vmem:[%s135 + $0x9f8] sm:$0xff] %v457
        %1482 = vst [vmem:[%s135 + $0xa00] sm:$0xff] %v458
        %1483 = vst [vmem:[%s135 + $0xa08] sm:$0xff] %v459
        %1484 = vst [vmem:[%s135 + $0xa10] sm:$0xff] %v460
        %1485 = vst [vmem:[%s135 + $0xa18] sm:$0xff] %v461
        %1486 = vst [vmem:[%s135 + $0xa20] sm:$0xff] %v462
        %1487 = vst [vmem:[%s135 + $0xa28] sm:$0xff] %v463
        %1488 = vst [vmem:[%s135 + $0xa30] sm:$0xff] %v464
        %1489 = vst [vmem:[%s135 + $0xa38] sm:$0xff] %v465
        %1490 = vst [vmem:[%s135 + $0xa40] sm:$0xff] %v466
        %1491 = vst [vmem:[%s135 + $0xa48] sm:$0xff] %v467
        %1492 = vst [vmem:[%s135 + $0xa50] sm:$0xff] %v468
        %1493 = vst [vmem:[%s135 + $0xa58] sm:$0xff] %v469
        %1494 = vst [vmem:[%s135 + $0xa60] sm:$0xff] %v470
        %1495 = vst [vmem:[%s135 + $0xa68] sm:$0xff] %v471
        %1496 = vst [vmem:[%s135 + $0xa70] sm:$0xff] %v472
        %1497 = vst [vmem:[%s135 + $0xa78] sm:$0xff] %v473
        %1498 = vst [vmem:[%s135 + $0xa80] sm:$0xff] %v474
        %1499 = vst [vmem:[%s135 + $0xa88] sm:$0xff] %v475
        %1500 = vst [vmem:[%s135 + $0xa90] sm:$0xff] %v476
        %1501 = vst [vmem:[%s135 + $0xa98] sm:$0xff] %v477
        %1502 = vst [vmem:[%s135 + $0xaa0] sm:$0xff] %v478
        %1503 = vst [vmem:[%s135 + $0xaa8] sm:$0xff] %v479
        %1504 = vst [vmem:[%s135 + $0xab0] sm:$0xff] %v480
        %1505 = vst [vmem:[%s135 + $0xab8] sm:$0xff] %v481
        %1506 = vst [vmem:[%s135 + $0xac0] sm:$0xff] %v482
        %1507 = vst [vmem:[%s135 + $0xac8] sm:$0xff] %v483
        %1508 = vst [vmem:[%s135 + $0xad0] sm:$0xff] %v484
        %1509 = vst [vmem:[%s135 + $0xad8] sm:$0xff] %v485
        %1510 = vst [vmem:[%s135 + $0xae0] sm:$0xff] %v486
        %1511 = vst [vmem:[%s135 + $0xae8] sm:$0xff] %v487
        %1512 = vst [vmem:[%s135 + $0xaf0] sm:$0xff] %v488
        %1513 = vst [vmem:[%s135 + $0xaf8] sm:$0xff] %v489
        %1514 = vst [vmem:[%s135 + $0xb00] sm:$0xff] %v490
        %1515 = vst [vmem:[%s135 + $0xb08] sm:$0xff] %v491
        %1516 = vst [vmem:[%s135 + $0xb10] sm:$0xff] %v492
        %1517 = vst [vmem:[%s135 + $0xb18] sm:$0xff] %v493
        %1518 = vst [vmem:[%s135 + $0xb20] sm:$0xff] %v494
        %1519 = vst [vmem:[%s135 + $0xb28] sm:$0xff] %v495
        %1520 = vst [vmem:[%s135 + $0xb30] sm:$0xff] %v496
        %1521 = vst [vmem:[%s135 + $0xb38] sm:$0xff] %v497
        %1522 = vst [vmem:[%s135 + $0xb40] sm:$0xff] %v498
        %1523 = vst [vmem:[%s135 + $0xb48] sm:$0xff] %v499
        %1524 = vst [vmem:[%s135 + $0xb50] sm:$0xff] %v500
        %1525 = vst [vmem:[%s135 + $0xb58] sm:$0xff] %v501
        %1526 = vst [vmem:[%s135 + $0xb60] sm:$0xff] %v502
        %1527 = vst [vmem:[%s135 + $0xb68] sm:$0xff] %v503
        %1528 = vst [vmem:[%s135 + $0xb70] sm:$0xff] %v504
        %1529 = vst [vmem:[%s135 + $0xb78] sm:$0xff] %v505
        %1530 = vst [vmem:[%s135 + $0xb80] sm:$0xff] %v506
        %1531 = vst [vmem:[%s135 + $0xb88] sm:$0xff] %v507
        %1532 = vst [vmem:[%s135 + $0xb90] sm:$0xff] %v508
        %1533 = vst [vmem:[%s135 + $0xb98] sm:$0xff] %v509
        %1534 = vst [vmem:[%s135 + $0xba0] sm:$0xff] %v510
        %1535 = vst [vmem:[%s135 + $0xba8] sm:$0xff] %v511
        %1536 = vst [vmem:[%s135 + $0xbb0] sm:$0xff] %v512
        %1537 = vst [vmem:[%s135 + $0xbb8] sm:$0xff] %v513
        %1538 = vst [vmem:[%s135 + $0xbc0] sm:$0xff] %v514
        %1539 = vst [vmem:[%s135 + $0xbc8] sm:$0xff] %v515
        %1540 = vst [vmem:[%s135 + $0xbd0] sm:$0xff] %v516
        %1541 = vst [vmem:[%s135 + $0xbd8] sm:$0xff] %v517
        %1542 = vst [vmem:[%s135 + $0xbe0] sm:$0xff] %v518
        %1543 = vst [vmem:[%s135 + $0xbe8] sm:$0xff] %v519
        %1544 = vst [vmem:[%s135 + $0xbf0] sm:$0xff] %v520
        %1545 = vst [vmem:[%s135 + $0xbf8] sm:$0xff] %v521
        %1546 = vst [vmem:[%s135 + $0xc00] sm:$0xff] %v522
        %1547 = vst [vmem:[%s135 + $0xc08] sm:$0xff] %v523
        %1548 = vst [vmem:[%s135 + $0xc10] sm:$0xff] %v524
        %1549 = vst [vmem:[%s135 + $0xc18] sm:$0xff] %v525
        %1550 = vst [vmem:[%s135 + $0xc20] sm:$0xff] %v526
        %1551 = vst [vmem:[%s135 + $0xc28] sm:$0xff] %v527
        %1552 = vst [vmem:[%s135 + $0xc30] sm:$0xff] %v528
        %1553 = vst [vmem:[%s135 + $0xc38] sm:$0xff] %v529
        %1554 = vst [vmem:[%s135 + $0xc40] sm:$0xff] %v530
        %1555 = vst [vmem:[%s135 + $0xc48] sm:$0xff] %v531
        %1556 = vst [vmem:[%s135 + $0xc50] sm:$0xff] %v532
        %1557 = vst [vmem:[%s135 + $0xc58] sm:$0xff] %v533
        %1558 = vst [vmem:[%s135 + $0xc60] sm:$0xff] %v534
        %1559 = vst [vmem:[%s135 + $0xc68] sm:$0xff] %v535
        %1560 = vst [vmem:[%s135 + $0xc70] sm:$0xff] %v536
        %1561 = vst [vmem:[%s135 + $0xc78] sm:$0xff] %v537
        %1562 = vst [vmem:[%s135 + $0xc80] sm:$0xff] %v538
        %1563 = vst [vmem:[%s135 + $0xc88] sm:$0xff] %v539
        %1564 = vst [vmem:[%s135 + $0xc90] sm:$0xff] %v540
        %1565 = vst [vmem:[%s135 + $0xc98] sm:$0xff] %v541
        %1566 = vst [vmem:[%s135 + $0xca0] sm:$0xff] %v542
        %1567 = vst [vmem:[%s135 + $0xca8] sm:$0xff] %v543
        %1568 = vst [vmem:[%s135 + $0xcb0] sm:$0xff] %v544
        %1569 = vst [vmem:[%s135 + $0xcb8] sm:$0xff] %v545
        %1570 = vst [vmem:[%s135 + $0xcc0] sm:$0xff] %v546
        %1571 = vst [vmem:[%s135 + $0xcc8] sm:$0xff] %v547
        %1572 = vst [vmem:[%s135 + $0xcd0] sm:$0xff] %v548
        %1573 = vst [vmem:[%s135 + $0xcd8] sm:$0xff] %v549
        %1574 = vst [vmem:[%s135 + $0xce0] sm:$0xff] %v550
        %1575 = vst [vmem:[%s135 + $0xce8] sm:$0xff] %v551
        %1576 = vst [vmem:[%s135 + $0xcf0] sm:$0xff] %v552
        %1577 = vst [vmem:[%s135 + $0xcf8] sm:$0xff] %v553
        %1578 = vst [vmem:[%s135 + $0xd00] sm:$0xff] %v554
        %1579 = vst [vmem:[%s135 + $0xd08] sm:$0xff] %v555
        %1580 = vst [vmem:[%s135 + $0xd10] sm:$0xff] %v556
        %1581 = vst [vmem:[%s135 + $0xd18] sm:$0xff] %v557
        %1582 = vst [vmem:[%s135 + $0xd20] sm:$0xff] %v558
        %1583 = vst [vmem:[%s135 + $0xd28] sm:$0xff] %v559
        %1584 = vst [vmem:[%s135 + $0xd30] sm:$0xff] %v560
        %1585 = vst [vmem:[%s135 + $0xd38] sm:$0xff] %v561
        %1586 = vst [vmem:[%s135 + $0xd40] sm:$0xff] %v562
        %1587 = vst [vmem:[%s135 + $0xd48] sm:$0xff] %v563
        %1588 = vst [vmem:[%s135 + $0xd50] sm:$0xff] %v564
        %1589 = vst [vmem:[%s135 + $0xd58] sm:$0xff] %v565
        %1590 = vst [vmem:[%s135 + $0xd60] sm:$0xff] %v566
        %1591 = vst [vmem:[%s135 + $0xd68] sm:$0xff] %v567
        %1592 = vst [vmem:[%s135 + $0xd70] sm:$0xff] %v568
        %1593 = vst [vmem:[%s135 + $0xd78] sm:$0xff] %v569
        %1594 = vst [vmem:[%s135 + $0xd80] sm:$0xff] %v570
        %1595 = vst [vmem:[%s135 + $0xd88] sm:$0xff] %v571
        %1596 = vst [vmem:[%s135 + $0xd90] sm:$0xff] %v572
        %1597 = vst [vmem:[%s135 + $0xd98] sm:$0xff] %v573
        %1598 = vst [vmem:[%s135 + $0xda0] sm:$0xff] %v574
        %1599 = vst [vmem:[%s135 + $0xda8] sm:$0xff] %v575
        %1600 = vst [vmem:[%s135 + $0xdb0] sm:$0xff] %v576
        %1601 = vst [vmem:[%s135 + $0xdb8] sm:$0xff] %v577
        %1602 = vst [vmem:[%s135 + $0xdc0] sm:$0xff] %v578
        %1603 = vst [vmem:[%s135 + $0xdc8] sm:$0xff] %v579
        %1604 = vst [vmem:[%s135 + $0xdd0] sm:$0xff] %v580
        %1605 = vst [vmem:[%s135 + $0xdd8] sm:$0xff] %v581
        %1606 = vst [vmem:[%s135 + $0xde0] sm:$0xff] %v582
        %1607 = vst [vmem:[%s135 + $0xde8] sm:$0xff] %v583
        %1608 = vst [vmem:[%s135 + $0xdf0] sm:$0xff] %v584
        %1609 = vst [vmem:[%s135 + $0xdf8] sm:$0xff] %v585
        %1610 = vst [vmem:[%s135 + $0xe00] sm:$0xff] %v586
        %1611 = vst [vmem:[%s135 + $0xe08] sm:$0xff] %v587
        %1612 = vst [vmem:[%s135 + $0xe10] sm:$0xff] %v588
        %1613 = vst [vmem:[%s135 + $0xe18] sm:$0xff] %v589
        %1614 = vst [vmem:[%s135 + $0xe20] sm:$0xff] %v590
        %1615 = vst [vmem:[%s135 + $0xe28] sm:$0xff] %v591
        %1616 = vst [vmem:[%s135 + $0xe30] sm:$0xff] %v592
        %1617 = vst [vmem:[%s135 + $0xe38] sm:$0xff] %v593
        %1618 = vst [vmem:[%s135 + $0xe40] sm:$0xff] %v594
        %1619 = vst [vmem:[%s135 + $0xe48] sm:$0xff] %v595
        %1620 = vst [vmem:[%s135 + $0xe50] sm:$0xff] %v596
        %1621 = vst [vmem:[%s135 + $0xe58] sm:$0xff] %v597
        %1622 = vst [vmem:[%s135 + $0xe60] sm:$0xff] %v598
        %1623 = vst [vmem:[%s135 + $0xe68] sm:$0xff] %v599
        %1624 = vst [vmem:[%s135 + $0xe70] sm:$0xff] %v600
        %1625 = vst [vmem:[%s135 + $0xe78] sm:$0xff] %v601
        %1626 = vst [vmem:[%s135 + $0xe80] sm:$0xff] %v602
        %1627 = vst [vmem:[%s135 + $0xe88] sm:$0xff] %v603
        %1628 = vst [vmem:[%s135 + $0xe90] sm:$0xff] %v604
        %1629 = vst [vmem:[%s135 + $0xe98] sm:$0xff] %v605
        %1630 = vst [vmem:[%s135 + $0xea0] sm:$0xff] %v606
        %1631 = vst [vmem:[%s135 + $0xea8] sm:$0xff] %v607
        %1632 = vst [vmem:[%s135 + $0xeb0] sm:$0xff] %v608
        %1633 = vst [vmem:[%s135 + $0xeb8] sm:$0xff] %v609
        %1634 = vst [vmem:[%s135 + $0xec0] sm:$0xff] %v610
        %1635 = vst [vmem:[%s135 + $0xec8] sm:$0xff] %v611
        %1636 = vst [vmem:[%s135 + $0xed0] sm:$0xff] %v612
        %1637 = vst [vmem:[%s135 + $0xed8] sm:$0xff] %v613
        %1638 = vst [vmem:[%s135 + $0xee0] sm:$0xff] %v614
        %1639 = vst [vmem:[%s135 + $0xee8] sm:$0xff] %v615
        %1640 = vst [vmem:[%s135 + $0xef0] sm:$0xff] %v616
        %1641 = vst [vmem:[%s135 + $0xef8] sm:$0xff] %v617
        %1642 = vst [vmem:[%s135 + $0xf00] sm:$0xff] %v618
        %1643 = vst [vmem:[%s135 + $0xf08] sm:$0xff] %v619
        %1644 = vst [vmem:[%s135 + $0xf10] sm:$0xff] %v620
        %1645 = vst [vmem:[%s135 + $0xf18] sm:$0xff] %v621
        %1646 = vst [vmem:[%s135 + $0xf20] sm:$0xff] %v622
        %1647 = vst [vmem:[%s135 + $0xf28] sm:$0xff] %v623
        %1648 = vst [vmem:[%s135 + $0xf30] sm:$0xff] %v624
        %1649 = vst [vmem:[%s135 + $0xf38] sm:$0xff] %v625
        %1650 = vst [vmem:[%s135 + $0xf40] sm:$0xff] %v626
        %1651 = vst [vmem:[%s135 + $0xf48] sm:$0xff] %v627
        %1652 = vst [vmem:[%s135 + $0xf50] sm:$0xff] %v628
        %1653 = vst [vmem:[%s135 + $0xf58] sm:$0xff] %v629
        %1654 = vst [vmem:[%s135 + $0xf60] sm:$0xff] %v630
        %1655 = vst [vmem:[%s135 + $0xf68] sm:$0xff] %v631
        %1656 = vst [vmem:[%s135 + $0xf70] sm:$0xff] %v632
        %1657 = vst [vmem:[%s135 + $0xf78] sm:$0xff] %v633
        %1658 = vst [vmem:[%s135 + $0xf80] sm:$0xff] %v634
        %1659 = vst [vmem:[%s135 + $0xf88] sm:$0xff] %v635
        %1660 = vst [vmem:[%s135 + $0xf90] sm:$0xff] %v636
        %1661 = vst [vmem:[%s135 + $0xf98] sm:$0xff] %v637
        %1662 = vst [vmem:[%s135 + $0xfa0] sm:$0xff] %v638
        %1663 = vst [vmem:[%s135 + $0xfa8] sm:$0xff] %v639
        %1664 = vst [vmem:[%s135 + $0xfb0] sm:$0xff] %v640
        %1665 = vst [vmem:[%s135 + $0xfb8] sm:$0xff] %v641
        %1666 = vst [vmem:[%s135 + $0xfc0] sm:$0xff] %v642
        %1667 = vst [vmem:[%s135 + $0xfc8] sm:$0xff] %v643
        %1668 = vst [vmem:[%s135 + $0xfd0] sm:$0xff] %v644
        %1669 = vst [vmem:[%s135 + $0xfd8] sm:$0xff] %v645
        %1670 = vst [vmem:[%s135 + $0xfe0] sm:$0xff] %v646
        %1671 = vst [vmem:[%s135 + $0xfe8] sm:$0xff] %v647
        %1672 = vst [vmem:[%s135 + $0xff0] sm:$0xff] %v648
        %1673 = vst [vmem:[%s135 + $0xff8] sm:$0xff] %v649
        %1674 = vst [vmem:[%s135 + $0x1000] sm:$0xff] %v650
        %1675 = vst [vmem:[%s135 + $0x1008] sm:$0xff] %v651
        %1676 = vst [vmem:[%s135 + $0x1010] sm:$0xff] %v652
        %1677 = vst [vmem:[%s135 + $0x1018] sm:$0xff] %v653
        %1678 = vst [vmem:[%s135 + $0x1020] sm:$0xff] %v654
        %1679 = vst [vmem:[%s135 + $0x1028] sm:$0xff] %v655
        %1680 = vst [vmem:[%s135 + $0x1030] sm:$0xff] %v656
        %1681 = vst [vmem:[%s135 + $0x1038] sm:$0xff] %v657
        %1682 = vst [vmem:[%s135 + $0x1040] sm:$0xff] %v658
        %1683 = vst [vmem:[%s135 + $0x1048] sm:$0xff] %v659
        %1684 = vst [vmem:[%s135 + $0x1050] sm:$0xff] %v660
        %1685 = vst [vmem:[%s135 + $0x1058] sm:$0xff] %v661
        %1686 = vst [vmem:[%s135 + $0x1060] sm:$0xff] %v662
        %1687 = vst [vmem:[%s135 + $0x1068] sm:$0xff] %v663
        %1688 = vst [vmem:[%s135 + $0x1070] sm:$0xff] %v664
        %1689 = vst [vmem:[%s135 + $0x1078] sm:$0xff] %v665
        %1690 = vst [vmem:[%s135 + $0x1080] sm:$0xff] %v666
        %1691 = vst [vmem:[%s135 + $0x1088] sm:$0xff] %v667
        %1692 = vst [vmem:[%s135 + $0x1090] sm:$0xff] %v668
        %1693 = vst [vmem:[%s135 + $0x1098] sm:$0xff] %v669
        %1694 = vst [vmem:[%s135 + $0x10a0] sm:$0xff] %v670
        %1695 = vst [vmem:[%s135 + $0x10a8] sm:$0xff] %v671
        %1696 = vst [vmem:[%s135 + $0x10b0] sm:$0xff] %v672
        %1697 = vst [vmem:[%s135 + $0x10b8] sm:$0xff] %v673
        %1698 = vst [vmem:[%s135 + $0x10c0] sm:$0xff] %v674
        %1699 = vst [vmem:[%s135 + $0x10c8] sm:$0xff] %v675
        %1700 = vst [vmem:[%s135 + $0x10d0] sm:$0xff] %v676
        %1701 = vst [vmem:[%s135 + $0x10d8] sm:$0xff] %v677
        %1702 = vst [vmem:[%s135 + $0x10e0] sm:$0xff] %v678
        %1703 = vst [vmem:[%s135 + $0x10e8] sm:$0xff] %v679
        %1704 = vst [vmem:[%s135 + $0x10f0] sm:$0xff] %v680
        %1705 = vst [vmem:[%s135 + $0x10f8] sm:$0xff] %v681
        %1706 = vst [vmem:[%s135 + $0x1100] sm:$0xff] %v682
        %1707 = vst [vmem:[%s135 + $0x1108] sm:$0xff] %v683
        %1708 = vst [vmem:[%s135 + $0x1110] sm:$0xff] %v684
        %1709 = vst [vmem:[%s135 + $0x1118] sm:$0xff] %v685
        %1710 = vst [vmem:[%s135 + $0x1120] sm:$0xff] %v686
        %1711 = vst [vmem:[%s135 + $0x1128] sm:$0xff] %v687
        %1712 = vst [vmem:[%s135 + $0x1130] sm:$0xff] %v688
        %1713 = vst [vmem:[%s135 + $0x1138] sm:$0xff] %v689
        %1714 = vst [vmem:[%s135 + $0x1140] sm:$0xff] %v690
        %1715 = vst [vmem:[%s135 + $0x1148] sm:$0xff] %v691
        %1716 = vst [vmem:[%s135 + $0x1150] sm:$0xff] %v692
        %1717 = vst [vmem:[%s135 + $0x1158] sm:$0xff] %v693
        %1718 = vst [vmem:[%s135 + $0x1160] sm:$0xff] %v694
        %1719 = vst [vmem:[%s135 + $0x1168] sm:$0xff] %v695
        %1720 = vst [vmem:[%s135 + $0x1170] sm:$0xff] %v696
        %1721 = vst [vmem:[%s135 + $0x1178] sm:$0xff] %v697
        %1722 = vst [vmem:[%s135 + $0x1180] sm:$0xff] %v698
        %1723 = vst [vmem:[%s135 + $0x1188] sm:$0xff] %v699
        %1724 = vst [vmem:[%s135 + $0x1190] sm:$0xff] %v700
        %1725 = vst [vmem:[%s135 + $0x1198] sm:$0xff] %v701
        %1726 = vst [vmem:[%s135 + $0x11a0] sm:$0xff] %v702
        %1727 = vst [vmem:[%s135 + $0x11a8] sm:$0xff] %v703
        %1728 = vst [vmem:[%s135 + $0x11b0] sm:$0xff] %v704
        %1729 = vst [vmem:[%s135 + $0x11b8] sm:$0xff] %v705
        %1730 = vst [vmem:[%s135 + $0x11c0] sm:$0xff] %v706
        %1731 = vst [vmem:[%s135 + $0x11c8] sm:$0xff] %v707
        %1732 = vst [vmem:[%s135 + $0x11d0] sm:$0xff] %v708
        %1733 = vst [vmem:[%s135 + $0x11d8] sm:$0xff] %v709
        %1734 = vst [vmem:[%s135 + $0x11e0] sm:$0xff] %v710
        %1735 = vst [vmem:[%s135 + $0x11e8] sm:$0xff] %v711
        %1736 = vst [vmem:[%s135 + $0x11f0] sm:$0xff] %v712
        %1737 = vst [vmem:[%s135 + $0x11f8] sm:$0xff] %v713
        %1738 = vst [vmem:[%s135 + $0x1200] sm:$0xff] %v714
        %1739 = vst [vmem:[%s135 + $0x1208] sm:$0xff] %v715
        %1740 = vst [vmem:[%s135 + $0x1210] sm:$0xff] %v716
        %1741 = vst [vmem:[%s135 + $0x1218] sm:$0xff] %v717
        %1742 = vst [vmem:[%s135 + $0x1220] sm:$0xff] %v718
        %1743 = vst [vmem:[%s135 + $0x1228] sm:$0xff] %v719
        %1744 = vst [vmem:[%s135 + $0x1230] sm:$0xff] %v720
        %1745 = vst [vmem:[%s135 + $0x1238] sm:$0xff] %v721
        %1746 = vst [vmem:[%s135 + $0x1240] sm:$0xff] %v722
        %1747 = vst [vmem:[%s135 + $0x1248] sm:$0xff] %v723
        %1748 = vst [vmem:[%s135 + $0x1250] sm:$0xff] %v724
        %1749 = vst [vmem:[%s135 + $0x1258] sm:$0xff] %v725
        %1750 = vst [vmem:[%s135 + $0x1260] sm:$0xff] %v726
        %1751 = vst [vmem:[%s135 + $0x1268] sm:$0xff] %v727
        %1752 = vst [vmem:[%s135 + $0x1270] sm:$0xff] %v728
        %1753 = vst [vmem:[%s135 + $0x1278] sm:$0xff] %v729
        %1754 = vst [vmem:[%s135 + $0x1280] sm:$0xff] %v730
        %1755 = vst [vmem:[%s135 + $0x1288] sm:$0xff] %v731
        %1756 = vst [vmem:[%s135 + $0x1290] sm:$0xff] %v732
        %1757 = vst [vmem:[%s135 + $0x1298] sm:$0xff] %v733
        %1758 = vst [vmem:[%s135 + $0x12a0] sm:$0xff] %v734
        %1759 = vst [vmem:[%s135 + $0x12a8] sm:$0xff] %v735
        %1760 = vst [vmem:[%s135 + $0x12b0] sm:$0xff] %v736
        %1761 = vst [vmem:[%s135 + $0x12b8] sm:$0xff] %v737
        %1762 = vst [vmem:[%s135 + $0x12c0] sm:$0xff] %v738
        %1763 = vst [vmem:[%s135 + $0x12c8] sm:$0xff] %v739
        %1764 = vst [vmem:[%s135 + $0x12d0] sm:$0xff] %v740
        %1765 = vst [vmem:[%s135 + $0x12d8] sm:$0xff] %v741
        %1766 = vst [vmem:[%s135 + $0x12e0] sm:$0xff] %v742
        %1767 = vst [vmem:[%s135 + $0x12e8] sm:$0xff] %v743
        %1768 = vst [vmem:[%s135 + $0x12f0] sm:$0xff] %v744
        %1769 = vst [vmem:[%s135 + $0x12f8] sm:$0xff] %v745
        %1770 = vst [vmem:[%s135 + $0x1300] sm:$0xff] %v746
        %1771 = vst [vmem:[%s135 + $0x1308] sm:$0xff] %v747
        %1772 = vst [vmem:[%s135 + $0x1310] sm:$0xff] %v748
        %1773 = vst [vmem:[%s135 + $0x1318] sm:$0xff] %v749
        %1774 = vst [vmem:[%s135 + $0x1320] sm:$0xff] %v750
        %1775 = vst [vmem:[%s135 + $0x1328] sm:$0xff] %v751
        %1776 = vst [vmem:[%s135 + $0x1330] sm:$0xff] %v752
        %1777 = vst [vmem:[%s135 + $0x1338] sm:$0xff] %v753
        %1778 = vst [vmem:[%s135 + $0x1340] sm:$0xff] %v754
        %1779 = vst [vmem:[%s135 + $0x1348] sm:$0xff] %v755
        %1780 = vst [vmem:[%s135 + $0x1350] sm:$0xff] %v756
        %1781 = vst [vmem:[%s135 + $0x1358] sm:$0xff] %v757
        %1782 = vst [vmem:[%s135 + $0x1360] sm:$0xff] %v758
        %1783 = vst [vmem:[%s135 + $0x1368] sm:$0xff] %v759
        %1784 = vst [vmem:[%s135 + $0x1370] sm:$0xff] %v760
        %1785 = vst [vmem:[%s135 + $0x1378] sm:$0xff] %v761
        %1786 = vst [vmem:[%s135 + $0x1380] sm:$0xff] %v762
        %1787 = vst [vmem:[%s135 + $0x1388] sm:$0xff] %v763
        %1788 = vst [vmem:[%s135 + $0x1390] sm:$0xff] %v764
        %1789 = vst [vmem:[%s135 + $0x1398] sm:$0xff] %v765
        %1790 = vst [vmem:[%s135 + $0x13a0] sm:$0xff] %v766
        %1791 = vst [vmem:[%s135 + $0x13a8] sm:$0xff] %v767
        %1792 = vst [vmem:[%s135 + $0x13b0] sm:$0xff] %v768
        %1793 = vst [vmem:[%s135 + $0x13b8] sm:$0xff] %v769
        %1794 = vst [vmem:[%s135 + $0x13c0] sm:$0xff] %v770
        %1795 = vst [vmem:[%s135 + $0x13c8] sm:$0xff] %v771
        %1796 = vst [vmem:[%s135 + $0x13d0] sm:$0xff] %v772
        %1797 = vst [vmem:[%s135 + $0x13d8] sm:$0xff] %v773
        %1798 = vst [vmem:[%s135 + $0x13e0] sm:$0xff] %v774
        %1799 = vst [vmem:[%s135 + $0x13e8] sm:$0xff] %v775
        %1800 = vst [vmem:[%s135 + $0x13f0] sm:$0xff] %v776
        %1801 = vst [vmem:[%s135 + $0x13f8] sm:$0xff] %v777
        %1802 = vst [vmem:[%s135 + $0x1400] sm:$0xff] %v778
        %1803 = vst [vmem:[%s135 + $0x1408] sm:$0xff] %v779
        %1804 = vst [vmem:[%s135 + $0x1410] sm:$0xff] %v780
        %1805 = vst [vmem:[%s135 + $0x1418] sm:$0xff] %v781
        %1806 = vst [vmem:[%s135 + $0x1420] sm:$0xff] %v782
        %1807 = vst [vmem:[%s135 + $0x1428] sm:$0xff] %v783
        %1808 = vst [vmem:[%s135 + $0x1430] sm:$0xff] %v784
        %1809 = vst [vmem:[%s135 + $0x1438] sm:$0xff] %v785
        %1810 = vst [vmem:[%s135 + $0x1440] sm:$0xff] %v786
        %1811 = vst [vmem:[%s135 + $0x1448] sm:$0xff] %v787
        %1812 = vst [vmem:[%s135 + $0x1450] sm:$0xff] %v788
        %1813 = vst [vmem:[%s135 + $0x1458] sm:$0xff] %v789
        %1814 = vst [vmem:[%s135 + $0x1460] sm:$0xff] %v790
        %1815 = vst [vmem:[%s135 + $0x1468] sm:$0xff] %v791
        %1816 = vst [vmem:[%s135 + $0x1470] sm:$0xff] %v792
        %1817 = vst [vmem:[%s135 + $0x1478] sm:$0xff] %v793
        %1818 = vst [vmem:[%s135 + $0x1480] sm:$0xff] %v794
        %1819 = vst [vmem:[%s135 + $0x1488] sm:$0xff] %v795
        %1820 = vst [vmem:[%s135 + $0x1490] sm:$0xff] %v796
        %1821 = vst [vmem:[%s135 + $0x1498] sm:$0xff] %v797
        %1822 = vst [vmem:[%s135 + $0x14a0] sm:$0xff] %v798
        %1823 = vst [vmem:[%s135 + $0x14a8] sm:$0xff] %v799
        %1824 = vst [vmem:[%s135 + $0x14b0] sm:$0xff] %v800
        %1825 = vst [vmem:[%s135 + $0x14b8] sm:$0xff] %v801
        %1826 = vst [vmem:[%s135 + $0x14c0] sm:$0xff] %v802
        %1827 = vst [vmem:[%s135 + $0x14c8] sm:$0xff] %v803
        %1828 = vst [vmem:[%s135 + $0x14d0] sm:$0xff] %v804
        %1829 = vst [vmem:[%s135 + $0x14d8] sm:$0xff] %v805
        %1830 = vst [vmem:[%s135 + $0x14e0] sm:$0xff] %v806
        %1831 = vst [vmem:[%s135 + $0x14e8] sm:$0xff] %v807
        %1832 = vst [vmem:[%s135 + $0x14f0] sm:$0xff] %v808
        %1833 = vst [vmem:[%s135 + $0x14f8] sm:$0xff] %v809
        %1834 = vst [vmem:[%s135 + $0x1500] sm:$0xff] %v810
        %1835 = vst [vmem:[%s135 + $0x1508] sm:$0xff] %v811
        %1836 = vst [vmem:[%s135 + $0x1510] sm:$0xff] %v812
        %1837 = vst [vmem:[%s135 + $0x1518] sm:$0xff] %v813
        %1838 = vst [vmem:[%s135 + $0x1520] sm:$0xff] %v814
        %1839 = vst [vmem:[%s135 + $0x1528] sm:$0xff] %v815
        %1840 = vst [vmem:[%s135 + $0x1530] sm:$0xff] %v816
        %1841 = vst [vmem:[%s135 + $0x1538] sm:$0xff] %v817
        %1842 = vst [vmem:[%s135 + $0x1540] sm:$0xff] %v818
        %1843 = vst [vmem:[%s135 + $0x1548] sm:$0xff] %v819
        %1844 = vst [vmem:[%s135 + $0x1550] sm:$0xff] %v820
        %1845 = vst [vmem:[%s135 + $0x1558] sm:$0xff] %v821
        %1846 = vst [vmem:[%s135 + $0x1560] sm:$0xff] %v822
        %1847 = vst [vmem:[%s135 + $0x1568] sm:$0xff] %v823
        %1848 = vst [vmem:[%s135 + $0x1570] sm:$0xff] %v824
        %1849 = vst [vmem:[%s135 + $0x1578] sm:$0xff] %v825
        %1850 = vst [vmem:[%s135 + $0x1580] sm:$0xff] %v826
        %1851 = vst [vmem:[%s135 + $0x1588] sm:$0xff] %v827
        %1852 = vst [vmem:[%s135 + $0x1590] sm:$0xff] %v828
        %1853 = vst [vmem:[%s135 + $0x1598] sm:$0xff] %v829
        %1854 = vst [vmem:[%s135 + $0x15a0] sm:$0xff] %v830
        %1855 = vst [vmem:[%s135 + $0x15a8] sm:$0xff] %v831
        %1856 = vst [vmem:[%s135 + $0x15b0] sm:$0xff] %v832
        %1857 = vst [vmem:[%s135 + $0x15b8] sm:$0xff] %v833
        %1858 = vst [vmem:[%s135 + $0x15c0] sm:$0xff] %v834
        %1859 = vst [vmem:[%s135 + $0x15c8] sm:$0xff] %v835
        %1860 = vst [vmem:[%s135 + $0x15d0] sm:$0xff] %v836
        %1861 = vst [vmem:[%s135 + $0x15d8] sm:$0xff] %v837
        %1862 = vst [vmem:[%s135 + $0x15e0] sm:$0xff] %v838
        %1863 = vst [vmem:[%s135 + $0x15e8] sm:$0xff] %v839
        %1864 = vst [vmem:[%s135 + $0x15f0] sm:$0xff] %v840
        %1865 = vst [vmem:[%s135 + $0x15f8] sm:$0xff] %v841
        %1866 = vst [vmem:[%s135 + $0x1600] sm:$0xff] %v842
        %1867 = vst [vmem:[%s135 + $0x1608] sm:$0xff] %v843
        %1868 = vst [vmem:[%s135 + $0x1610] sm:$0xff] %v844
        %1869 = vst [vmem:[%s135 + $0x1618] sm:$0xff] %v845
        %1870 = vst [vmem:[%s135 + $0x1620] sm:$0xff] %v846
        %1871 = vst [vmem:[%s135 + $0x1628] sm:$0xff] %v847
        %1872 = vst [vmem:[%s135 + $0x1630] sm:$0xff] %v848
        %1873 = vst [vmem:[%s135 + $0x1638] sm:$0xff] %v849
        %1874 = vst [vmem:[%s135 + $0x1640] sm:$0xff] %v850
        %1875 = vst [vmem:[%s135 + $0x1648] sm:$0xff] %v851
        %1876 = vst [vmem:[%s135 + $0x1650] sm:$0xff] %v852
        %1877 = vst [vmem:[%s135 + $0x1658] sm:$0xff] %v853
        %1878 = vst [vmem:[%s135 + $0x1660] sm:$0xff] %v854
        %1879 = vst [vmem:[%s135 + $0x1668] sm:$0xff] %v855
        %1880 = vst [vmem:[%s135 + $0x1670] sm:$0xff] %v856
        %1881 = vst [vmem:[%s135 + $0x1678] sm:$0xff] %v857
        %1882 = vst [vmem:[%s135 + $0x1680] sm:$0xff] %v858
        %1883 = vst [vmem:[%s135 + $0x1688] sm:$0xff] %v859
        %1884 = vst [vmem:[%s135 + $0x1690] sm:$0xff] %v860
        %1885 = vst [vmem:[%s135 + $0x1698] sm:$0xff] %v861
        %1886 = vst [vmem:[%s135 + $0x16a0] sm:$0xff] %v862
        %1887 = vst [vmem:[%s135 + $0x16a8] sm:$0xff] %v863
        %1888 = vst [vmem:[%s135 + $0x16b0] sm:$0xff] %v864
        %1889 = vst [vmem:[%s135 + $0x16b8] sm:$0xff] %v865
        %1890 = vst [vmem:[%s135 + $0x16c0] sm:$0xff] %v866
        %1891 = vst [vmem:[%s135 + $0x16c8] sm:$0xff] %v867
        %1892 = vst [vmem:[%s135 + $0x16d0] sm:$0xff] %v868
        %1893 = vst [vmem:[%s135 + $0x16d8] sm:$0xff] %v869
        %1894 = vst [vmem:[%s135 + $0x16e0] sm:$0xff] %v870
        %1895 = vst [vmem:[%s135 + $0x16e8] sm:$0xff] %v871
        %1896 = vst [vmem:[%s135 + $0x16f0] sm:$0xff] %v872
        %1897 = vst [vmem:[%s135 + $0x16f8] sm:$0xff] %v873
        %1898 = vst [vmem:[%s135 + $0x1700] sm:$0xff] %v874
        %1899 = vst [vmem:[%s135 + $0x1708] sm:$0xff] %v875
        %1900 = vst [vmem:[%s135 + $0x1710] sm:$0xff] %v876
        %1901 = vst [vmem:[%s135 + $0x1718] sm:$0xff] %v877
        %1902 = vst [vmem:[%s135 + $0x1720] sm:$0xff] %v878
        %1903 = vst [vmem:[%s135 + $0x1728] sm:$0xff] %v879
        %1904 = vst [vmem:[%s135 + $0x1730] sm:$0xff] %v880
        %1905 = vst [vmem:[%s135 + $0x1738] sm:$0xff] %v881
        %1906 = vst [vmem:[%s135 + $0x1740] sm:$0xff] %v882
        %1907 = vst [vmem:[%s135 + $0x1748] sm:$0xff] %v883
        %1908 = vst [vmem:[%s135 + $0x1750] sm:$0xff] %v884
        %1909 = vst [vmem:[%s135 + $0x1758] sm:$0xff] %v885
        %1910 = vst [vmem:[%s135 + $0x1760] sm:$0xff] %v886
        %1911 = vst [vmem:[%s135 + $0x1768] sm:$0xff] %v887
        %1912 = vst [vmem:[%s135 + $0x1770] sm:$0xff] %v888
        %1913 = vst [vmem:[%s135 + $0x1778] sm:$0xff] %v889
        %1914 = vst [vmem:[%s135 + $0x1780] sm:$0xff] %v890
        %1915 = vst [vmem:[%s135 + $0x1788] sm:$0xff] %v891
        %1916 = vst [vmem:[%s135 + $0x1790] sm:$0xff] %v892
        %1917 = vst [vmem:[%s135 + $0x1798] sm:$0xff] %v893
        %1918 = vst [vmem:[%s135 + $0x17a0] sm:$0xff] %v894
        %1919 = vst [vmem:[%s135 + $0x17a8] sm:$0xff] %v895
        %1920 = vst [vmem:[%s135 + $0x17b0] sm:$0xff] %v896
        %1921 = vst [vmem:[%s135 + $0x17b8] sm:$0xff] %v897
        %1922 = vst [vmem:[%s135 + $0x17c0] sm:$0xff] %v898
        %1923 = vst [vmem:[%s135 + $0x17c8] sm:$0xff] %v899
        %1924 = vst [vmem:[%s135 + $0x17d0] sm:$0xff] %v900
        %1925 = vst [vmem:[%s135 + $0x17d8] sm:$0xff] %v901
        %1926 = vst [vmem:[%s135 + $0x17e0] sm:$0xff] %v902
        %1927 = vst [vmem:[%s135 + $0x17e8] sm:$0xff] %v903
        %1928 = vst [vmem:[%s135 + $0x17f0] sm:$0xff] %v904
        %1929 = vst [vmem:[%s135 + $0x17f8] sm:$0xff] %v905
        %1930 = vst [vmem:[%s135 + $0x1800] sm:$0xff] %v906
        %1931 = vst [vmem:[%s135 + $0x1808] sm:$0xff] %v907
        %1932 = vst [vmem:[%s135 + $0x1810] sm:$0xff] %v908
        %1933 = vst [vmem:[%s135 + $0x1818] sm:$0xff] %v909
        %1934 = vst [vmem:[%s135 + $0x1820] sm:$0xff] %v910
        %1935 = vst [vmem:[%s135 + $0x1828] sm:$0xff] %v911
        %1936 = vst [vmem:[%s135 + $0x1830] sm:$0xff] %v912
        %1937 = vst [vmem:[%s135 + $0x1838] sm:$0xff] %v913
        %1938 = vst [vmem:[%s135 + $0x1840] sm:$0xff] %v914
        %1939 = vst [vmem:[%s135 + $0x1848] sm:$0xff] %v915
        %1940 = vst [vmem:[%s135 + $0x1850] sm:$0xff] %v916
        %1941 = vst [vmem:[%s135 + $0x1858] sm:$0xff] %v917
        %1942 = vst [vmem:[%s135 + $0x1860] sm:$0xff] %v918
        %1943 = vst [vmem:[%s135 + $0x1868] sm:$0xff] %v919
        %1944 = vst [vmem:[%s135 + $0x1870] sm:$0xff] %v920
        %1945 = vst [vmem:[%s135 + $0x1878] sm:$0xff] %v921
        %1946 = vst [vmem:[%s135 + $0x1880] sm:$0xff] %v922
        %1947 = vst [vmem:[%s135 + $0x1888] sm:$0xff] %v923
        %1948 = vst [vmem:[%s135 + $0x1890] sm:$0xff] %v924
        %1949 = vst [vmem:[%s135 + $0x1898] sm:$0xff] %v925
        %1950 = vst [vmem:[%s135 + $0x18a0] sm:$0xff] %v926
        %1951 = vst [vmem:[%s135 + $0x18a8] sm:$0xff] %v927
        %1952 = vst [vmem:[%s135 + $0x18b0] sm:$0xff] %v928
        %1953 = vst [vmem:[%s135 + $0x18b8] sm:$0xff] %v929
        %1954 = vst [vmem:[%s135 + $0x18c0] sm:$0xff] %v930
        %1955 = vst [vmem:[%s135 + $0x18c8] sm:$0xff] %v931
        %1956 = vst [vmem:[%s135 + $0x18d0] sm:$0xff] %v932
        %1957 = vst [vmem:[%s135 + $0x18d8] sm:$0xff] %v933
        %1958 = vst [vmem:[%s135 + $0x18e0] sm:$0xff] %v934
        %1959 = vst [vmem:[%s135 + $0x18e8] sm:$0xff] %v935
        %1960 = vst [vmem:[%s135 + $0x18f0] sm:$0xff] %v936
        %1961 = vst [vmem:[%s135 + $0x18f8] sm:$0xff] %v937
        %1962 = vst [vmem:[%s135 + $0x1900] sm:$0xff] %v938
        %1963 = vst [vmem:[%s135 + $0x1908] sm:$0xff] %v939
        %1964 = vst [vmem:[%s135 + $0x1910] sm:$0xff] %v940
        %1965 = vst [vmem:[%s135 + $0x1918] sm:$0xff] %v941
        %1966 = vst [vmem:[%s135 + $0x1920] sm:$0xff] %v942
        %1967 = vst [vmem:[%s135 + $0x1928] sm:$0xff] %v943
        %1968 = vst [vmem:[%s135 + $0x1930] sm:$0xff] %v944
        %1969 = vst [vmem:[%s135 + $0x1938] sm:$0xff] %v945
        %1970 = vst [vmem:[%s135 + $0x1940] sm:$0xff] %v946
        %1971 = vst [vmem:[%s135 + $0x1948] sm:$0xff] %v947
        %1972 = vst [vmem:[%s135 + $0x1950] sm:$0xff] %v948
        %1973 = vst [vmem:[%s135 + $0x1958] sm:$0xff] %v949
        %1974 = vst [vmem:[%s135 + $0x1960] sm:$0xff] %v950
        %1975 = vst [vmem:[%s135 + $0x1968] sm:$0xff] %v951
        %1976 = vst [vmem:[%s135 + $0x1970] sm:$0xff] %v952
        %1977 = vst [vmem:[%s135 + $0x1978] sm:$0xff] %v953
        %1978 = vst [vmem:[%s135 + $0x1980] sm:$0xff] %v954
        %1979 = vst [vmem:[%s135 + $0x1988] sm:$0xff] %v955
        %1980 = vst [vmem:[%s135 + $0x1990] sm:$0xff] %v956
        %1981 = vst [vmem:[%s135 + $0x1998] sm:$0xff] %v957
        %1982 = vst [vmem:[%s135 + $0x19a0] sm:$0xff] %v958
        %1983 = vst [vmem:[%s135 + $0x19a8] sm:$0xff] %v959
        %1984 = vst [vmem:[%s135 + $0x19b0] sm:$0xff] %v960
        %1985 = vst [vmem:[%s135 + $0x19b8] sm:$0xff] %v961
        %1986 = vst [vmem:[%s135 + $0x19c0] sm:$0xff] %v962
        %1987 = vst [vmem:[%s135 + $0x19c8] sm:$0xff] %v963
        %1988 = vst [vmem:[%s135 + $0x19d0] sm:$0xff] %v964
        %1989 = vst [vmem:[%s135 + $0x19d8] sm:$0xff] %v965
        %1990 = vst [vmem:[%s135 + $0x19e0] sm:$0xff] %v966
        %1991 = vst [vmem:[%s135 + $0x19e8] sm:$0xff] %v967
        %1992 = vst [vmem:[%s135 + $0x19f0] sm:$0xff] %v968
        %1993 = vst [vmem:[%s135 + $0x19f8] sm:$0xff] %v969
        %1994 = vst [vmem:[%s135 + $0x1a00] sm:$0xff] %v970
        %1995 = vst [vmem:[%s135 + $0x1a08] sm:$0xff] %v971
        %1996 = vst [vmem:[%s135 + $0x1a10] sm:$0xff] %v972
        %1997 = vst [vmem:[%s135 + $0x1a18] sm:$0xff] %v973
        %1998 = vst [vmem:[%s135 + $0x1a20] sm:$0xff] %v974
        %1999 = vst [vmem:[%s135 + $0x1a28] sm:$0xff] %v975
        %2000 = vst [vmem:[%s135 + $0x1a30] sm:$0xff] %v976
        %2001 = vst [vmem:[%s135 + $0x1a38] sm:$0xff] %v977
        %2002 = vst [vmem:[%s135 + $0x1a40] sm:$0xff] %v978
        %2003 = vst [vmem:[%s135 + $0x1a48] sm:$0xff] %v979
        %2004 = vst [vmem:[%s135 + $0x1a50] sm:$0xff] %v980
        %2005 = vst [vmem:[%s135 + $0x1a58] sm:$0xff] %v981
        %2006 = vst [vmem:[%s135 + $0x1a60] sm:$0xff] %v982
        %2007 = vst [vmem:[%s135 + $0x1a68] sm:$0xff] %v983
        %2008 = vst [vmem:[%s135 + $0x1a70] sm:$0xff] %v984
        %2009 = vst [vmem:[%s135 + $0x1a78] sm:$0xff] %v985
        %2010 = vst [vmem:[%s135 + $0x1a80] sm:$0xff] %v986
        %2011 = vst [vmem:[%s135 + $0x1a88] sm:$0xff] %v987
        %2012 = vst [vmem:[%s135 + $0x1a90] sm:$0xff] %v988
        %2013 = vst [vmem:[%s135 + $0x1a98] sm:$0xff] %v989
        %2014 = vst [vmem:[%s135 + $0x1aa0] sm:$0xff] %v990
        %2015 = vst [vmem:[%s135 + $0x1aa8] sm:$0xff] %v991
        %2016 = vst [vmem:[%s135 + $0x1ab0] sm:$0xff] %v992
        %2017 = vst [vmem:[%s135 + $0x1ab8] sm:$0xff] %v993
        %2018 = vst [vmem:[%s135 + $0x1ac0] sm:$0xff] %v994
        %2019 = vst [vmem:[%s135 + $0x1ac8] sm:$0xff] %v995
        %2020 = vst [vmem:[%s135 + $0x1ad0] sm:$0xff] %v996
        %2021 = vst [vmem:[%s135 + $0x1ad8] sm:$0xff] %v997
        %2022 = vst [vmem:[%s135 + $0x1ae0] sm:$0xff] %v998
        %2023 = vst [vmem:[%s135 + $0x1ae8] sm:$0xff] %v999
        %2024 = vst [vmem:[%s135 + $0x1af0] sm:$0xff] %v1000
        %2025 = vst [vmem:[%s135 + $0x1af8] sm:$0xff] %v1001
        %2026 = vst [vmem:[%s135 + $0x1b00] sm:$0xff] %v1002
        %2027 = vst [vmem:[%s135 + $0x1b08] sm:$0xff] %v1003
        %2028 = vst [vmem:[%s135 + $0x1b10] sm:$0xff] %v1004
        %2029 = vst [vmem:[%s135 + $0x1b18] sm:$0xff] %v1005
        %2030 = vst [vmem:[%s135 + $0x1b20] sm:$0xff] %v1006
        %2031 = vst [vmem:[%s135 + $0x1b28] sm:$0xff] %v1007
        %2032 = vst [vmem:[%s135 + $0x1b30] sm:$0xff] %v1008
        %2033 = vst [vmem:[%s135 + $0x1b38] sm:$0xff] %v1009
        %2034 = vst [vmem:[%s135 + $0x1b40] sm:$0xff] %v1010
        %2035 = vst [vmem:[%s135 + $0x1b48] sm:$0xff] %v1011
        %2036 = vst [vmem:[%s135 + $0x1b50] sm:$0xff] %v1012
        %2037 = vst [vmem:[%s135 + $0x1b58] sm:$0xff] %v1013
        %2038 = vst [vmem:[%s135 + $0x1b60] sm:$0xff] %v1014
        %2039 = vst [vmem:[%s135 + $0x1b68] sm:$0xff] %v1015
        %2040 = vst [vmem:[%s135 + $0x1b70] sm:$0xff] %v1016
        %2041 = vst [vmem:[%s135 + $0x1b78] sm:$0xff] %v1017
        %2042 = vst [vmem:[%s135 + $0x1b80] sm:$0xff] %v1018
        %2043 = vst [vmem:[%s135 + $0x1b88] sm:$0xff] %v1019
        %2044 = vst [vmem:[%s135 + $0x1b90] sm:$0xff] %v1020
        %2045 = vst [vmem:[%s135 + $0x1b98] sm:$0xff] %v1021
        %2046 = vst [vmem:[%s135 + $0x1ba0] sm:$0xff] %v1022
        %2047 = vst [vmem:[%s135 + $0x1ba8] sm:$0xff] %v1023
        %2048 = vst [vmem:[%s135 + $0x1bb0] sm:$0xff] %v1024
        %2049 = vst [vmem:[%s135 + $0x1bb8] sm:$0xff] %v1025
        %2050 = vst [vmem:[%s135 + $0x1bc0] sm:$0xff] %v1026
        %2051 = vst [vmem:[%s135 + $0x1bc8] sm:$0xff] %v1027
        %2052 = vst [vmem:[%s135 + $0x1bd0] sm:$0xff] %v1028
        %2053 = vst [vmem:[%s135 + $0x1bd8] sm:$0xff] %v1029
        %2054 = vst [vmem:[%s135 + $0x1be0] sm:$0xff] %v1030
        %2055 = vst [vmem:[%s135 + $0x1be8] sm:$0xff] %v1031
        %2056 = vst [vmem:[%s135 + $0x1bf0] sm:$0xff] %v1032
        %2057 = vst [vmem:[%s135 + $0x1bf8] sm:$0xff] %v1033
        %2058 = vst [vmem:[%s135 + $0x1c00] sm:$0xff] %v1034
        %2059 = vst [vmem:[%s135 + $0x1c08] sm:$0xff] %v1035
        %2060 = vst [vmem:[%s135 + $0x1c10] sm:$0xff] %v1036
        %2061 = vst [vmem:[%s135 + $0x1c18] sm:$0xff] %v1037
        %2062 = vst [vmem:[%s135 + $0x1c20] sm:$0xff] %v1038
        %2063 = vst [vmem:[%s135 + $0x1c28] sm:$0xff] %v1039
        %2064 = vst [vmem:[%s135 + $0x1c30] sm:$0xff] %v1040
        %2065 = vst [vmem:[%s135 + $0x1c38] sm:$0xff] %v1041
        %2066 = vst [vmem:[%s135 + $0x1c40] sm:$0xff] %v1042
        %2067 = vst [vmem:[%s135 + $0x1c48] sm:$0xff] %v1043
        %2068 = vst [vmem:[%s135 + $0x1c50] sm:$0xff] %v1044
        %2069 = vst [vmem:[%s135 + $0x1c58] sm:$0xff] %v1045
        %2070 = vst [vmem:[%s135 + $0x1c60] sm:$0xff] %v1046
        %2071 = vst [vmem:[%s135 + $0x1c68] sm:$0xff] %v1047
        %2072 = vst [vmem:[%s135 + $0x1c70] sm:$0xff] %v1048
        %2073 = vst [vmem:[%s135 + $0x1c78] sm:$0xff] %v1049
        %2074 = vst [vmem:[%s135 + $0x1c80] sm:$0xff] %v1050
        %2075 = vst [vmem:[%s135 + $0x1c88] sm:$0xff] %v1051
        %2076 = vst [vmem:[%s135 + $0x1c90] sm:$0xff] %v1052
        %2077 = vst [vmem:[%s135 + $0x1c98] sm:$0xff] %v1053
        %2078 = vst [vmem:[%s135 + $0x1ca0] sm:$0xff] %v1054
        %2079 = vst [vmem:[%s135 + $0x1ca8] sm:$0xff] %v1055
        %2080 = vst [vmem:[%s135 + $0x1cb0] sm:$0xff] %v1056
        %2081 = vst [vmem:[%s135 + $0x1cb8] sm:$0xff] %v1057
        %2082 = vst [vmem:[%s135 + $0x1cc0] sm:$0xff] %v1058
        %2083 = vst [vmem:[%s135 + $0x1cc8] sm:$0xff] %v1059
        %2084 = vst [vmem:[%s135 + $0x1cd0] sm:$0xff] %v1060
        %2085 = vst [vmem:[%s135 + $0x1cd8] sm:$0xff] %v1061
        %2086 = vst [vmem:[%s135 + $0x1ce0] sm:$0xff] %v1062
        %2087 = vst [vmem:[%s135 + $0x1ce8] sm:$0xff] %v1063
        %2088 = vst [vmem:[%s135 + $0x1cf0] sm:$0xff] %v1064
        %2089 = vst [vmem:[%s135 + $0x1cf8] sm:$0xff] %v1065
        %2090 = vst [vmem:[%s135 + $0x1d00] sm:$0xff] %v1066
        %2091 = vst [vmem:[%s135 + $0x1d08] sm:$0xff] %v1067
        %2092 = vst [vmem:[%s135 + $0x1d10] sm:$0xff] %v1068
        %2093 = vst [vmem:[%s135 + $0x1d18] sm:$0xff] %v1069
        %2094 = vst [vmem:[%s135 + $0x1d20] sm:$0xff] %v1070
        %2095 = vst [vmem:[%s135 + $0x1d28] sm:$0xff] %v1071
        %2096 = vst [vmem:[%s135 + $0x1d30] sm:$0xff] %v1072
        %2097 = vst [vmem:[%s135 + $0x1d38] sm:$0xff] %v1073
        %2098 = vst [vmem:[%s135 + $0x1d40] sm:$0xff] %v1074
        %2099 = vst [vmem:[%s135 + $0x1d48] sm:$0xff] %v1075
        %2100 = vst [vmem:[%s135 + $0x1d50] sm:$0xff] %v1076
        %2101 = vst [vmem:[%s135 + $0x1d58] sm:$0xff] %v1077
        %2102 = vst [vmem:[%s135 + $0x1d60] sm:$0xff] %v1078
        %2103 = vst [vmem:[%s135 + $0x1d68] sm:$0xff] %v1079
        %2104 = vst [vmem:[%s135 + $0x1d70] sm:$0xff] %v1080
        %2105 = vst [vmem:[%s135 + $0x1d78] sm:$0xff] %v1081
        %2106 = vst [vmem:[%s135 + $0x1d80] sm:$0xff] %v1082
        %2107 = vst [vmem:[%s135 + $0x1d88] sm:$0xff] %v1083
        %2108 = vst [vmem:[%s135 + $0x1d90] sm:$0xff] %v1084
        %2109 = vst [vmem:[%s135 + $0x1d98] sm:$0xff] %v1085
        %2110 = vst [vmem:[%s135 + $0x1da0] sm:$0xff] %v1086
        %2111 = vst [vmem:[%s135 + $0x1da8] sm:$0xff] %v1087
        %2112 = vst [vmem:[%s135 + $0x1db0] sm:$0xff] %v1088
        %2113 = vst [vmem:[%s135 + $0x1db8] sm:$0xff] %v1089
        %2114 = vst [vmem:[%s135 + $0x1dc0] sm:$0xff] %v1090
        %2115 = vst [vmem:[%s135 + $0x1dc8] sm:$0xff] %v1091
        %2116 = vst [vmem:[%s135 + $0x1dd0] sm:$0xff] %v1092
        %2117 = vst [vmem:[%s135 + $0x1dd8] sm:$0xff] %v1093
        %2118 = vst [vmem:[%s135 + $0x1de0] sm:$0xff] %v1094
        %2119 = vst [vmem:[%s135 + $0x1de8] sm:$0xff] %v1095
        %2120 = vst [vmem:[%s135 + $0x1df0] sm:$0xff] %v1096
        %2121 = vst [vmem:[%s135 + $0x1df8] sm:$0xff] %v1097
        %2122 = vst [vmem:[%s135 + $0x1e00] sm:$0xff] %v1098
        %2123 = vst [vmem:[%s135 + $0x1e08] sm:$0xff] %v1099
        %2124 = vst [vmem:[%s135 + $0x1e10] sm:$0xff] %v1100
        %2125 = vst [vmem:[%s135 + $0x1e18] sm:$0xff] %v1101
        %2126 = vst [vmem:[%s135 + $0x1e20] sm:$0xff] %v1102
        %2127 = vst [vmem:[%s135 + $0x1e28] sm:$0xff] %v1103
        %2128 = vst [vmem:[%s135 + $0x1e30] sm:$0xff] %v1104
        %2129 = vst [vmem:[%s135 + $0x1e38] sm:$0xff] %v1105
        %2130 = vst [vmem:[%s135 + $0x1e40] sm:$0xff] %v1106
        %2131 = vst [vmem:[%s135 + $0x1e48] sm:$0xff] %v1107
        %2132 = vst [vmem:[%s135 + $0x1e50] sm:$0xff] %v1108
        %2133 = vst [vmem:[%s135 + $0x1e58] sm:$0xff] %v1109
        %2134 = vst [vmem:[%s135 + $0x1e60] sm:$0xff] %v1110
        %2135 = vst [vmem:[%s135 + $0x1e68] sm:$0xff] %v1111
        %2136 = vst [vmem:[%s135 + $0x1e70] sm:$0xff] %v1112
        %2137 = vst [vmem:[%s135 + $0x1e78] sm:$0xff] %v1113
        %2138 = vst [vmem:[%s135 + $0x1e80] sm:$0xff] %v1114
        %2139 = vst [vmem:[%s135 + $0x1e88] sm:$0xff] %v1115
        %2140 = vst [vmem:[%s135 + $0x1e90] sm:$0xff] %v1116
        %2141 = vst [vmem:[%s135 + $0x1e98] sm:$0xff] %v1117
        %2142 = vst [vmem:[%s135 + $0x1ea0] sm:$0xff] %v1118
        %2143 = vst [vmem:[%s135 + $0x1ea8] sm:$0xff] %v1119
        %2144 = vst [vmem:[%s135 + $0x1eb0] sm:$0xff] %v1120
        %2145 = vst [vmem:[%s135 + $0x1eb8] sm:$0xff] %v1121
        %2146 = vst [vmem:[%s135 + $0x1ec0] sm:$0xff] %v1122
        %2147 = vst [vmem:[%s135 + $0x1ec8] sm:$0xff] %v1123
        %2148 = vst [vmem:[%s135 + $0x1ed0] sm:$0xff] %v1124
        %2149 = vst [vmem:[%s135 + $0x1ed8] sm:$0xff] %v1125
        %2150 = vst [vmem:[%s135 + $0x1ee0] sm:$0xff] %v1126
        %2151 = vst [vmem:[%s135 + $0x1ee8] sm:$0xff] %v1127
        %2152 = vst [vmem:[%s135 + $0x1ef0] sm:$0xff] %v1128
        %2153 = vst [vmem:[%s135 + $0x1ef8] sm:$0xff] %v1129
        %2154 = vst [vmem:[%s135 + $0x1f00] sm:$0xff] %v1130
        %2155 = vst [vmem:[%s135 + $0x1f08] sm:$0xff] %v1131
        %2156 = vst [vmem:[%s135 + $0x1f10] sm:$0xff] %v1132
        %2157 = vst [vmem:[%s135 + $0x1f18] sm:$0xff] %v1133
        %2158 = vst [vmem:[%s135 + $0x1f20] sm:$0xff] %v1134
        %2159 = vst [vmem:[%s135 + $0x1f28] sm:$0xff] %v1135
        %2160 = vst [vmem:[%s135 + $0x1f30] sm:$0xff] %v1136
        %2161 = vst [vmem:[%s135 + $0x1f38] sm:$0xff] %v1137
        %2162 = vst [vmem:[%s135 + $0x1f40] sm:$0xff] %v1138
        %2163 = vst [vmem:[%s135 + $0x1f48] sm:$0xff] %v1139
        %2164 = vst [vmem:[%s135 + $0x1f50] sm:$0xff] %v1140
        %2165 = vst [vmem:[%s135 + $0x1f58] sm:$0xff] %v1141
        %2166 = vst [vmem:[%s135 + $0x1f60] sm:$0xff] %v1142
        %2167 = vst [vmem:[%s135 + $0x1f68] sm:$0xff] %v1143
        %2168 = vst [vmem:[%s135 + $0x1f70] sm:$0xff] %v1144
        %2169 = vst [vmem:[%s135 + $0x1f78] sm:$0xff] %v1145
        %2170 = vst [vmem:[%s135 + $0x1f80] sm:$0xff] %v1146
        %2171 = vst [vmem:[%s135 + $0x1f88] sm:$0xff] %v1147
        %2172 = vst [vmem:[%s135 + $0x1f90] sm:$0xff] %v1148
        %2173 = vst [vmem:[%s135 + $0x1f98] sm:$0xff] %v1149
        %2174 = vst [vmem:[%s135 + $0x1fa0] sm:$0xff] %v1150
        %2175 = vst [vmem:[%s135 + $0x1fa8] sm:$0xff] %v1151
        %2176 = vst [vmem:[%s135 + $0x1fb0] sm:$0xff] %v1152
        %2177 = vst [vmem:[%s135 + $0x1fb8] sm:$0xff] %v1153
        %2178 = vst [vmem:[%s135 + $0x1fc0] sm:$0xff] %v1154
        %2179 = vst [vmem:[%s135 + $0x1fc8] sm:$0xff] %v1155
        %2180 = vst [vmem:[%s135 + $0x1fd0] sm:$0xff] %v1156
        %2181 = vst [vmem:[%s135 + $0x1fd8] sm:$0xff] %v1157
        %2182 = vst [vmem:[%s135 + $0x1fe0] sm:$0xff] %v1158
        %2183 = vst [vmem:[%s135 + $0x1fe8] sm:$0xff] %v1159
        %2184 = vst [vmem:[%s135 + $0x1ff0] sm:$0xff] %v1160
        %2185 = vst [vmem:[%s135 + $0x1ff8] sm:$0xff] %v1161
        %s2186 = sand.u32 %s52, 1
        %s2187 = scalar_lea.sflag [#allocation4], %s2186
        %s2188 = sand.u32 %s52, 1
        %s2189 = smul.addr %s2188, 8192
        %s2190 = scalar_lea.vmem [#allocation5], %s2189
        // Predicated region
        $region29: #{tpu_custom_call.1} parent=23 // pred_check
          %p2191 = pneg %p62
        $region30: #{tpu_custom_call.1} parent=23 // pred_check_branch
          %2193 = sbr.rel (%p2191) target = $region32
        $region31: #{tpu_custom_call.1} parent=23 // pred_region
          %s2194 = smul.u32 64, %s18
          %s2196 = ssub.s32 131072, 131072
          %2197 = vsyncadd %s2187, %s2196
          %s2198 = smul.addr %s2194, 16
          %s2199 = smul.addr %s2198, 128
          %s2200 = scalar_lea.hbm %s1, %s2199
          %s2201 = sshll.u32 %s2190, 4
          %s2202 = int_to_ptr.vmem [resolvable:$true] %s2201
          %2207 = dma.vmem_to_hbm [thread:$0]  %s2202, 131072, %s2200, %s2187, 2048, 2048, 128
        $region32: #{tpu_custom_call.1} parent=23 // pred_fallthru
          _
      $region24: #{tpu_custom_call.1} parent=5 // pred_fallthru
        _
      %p2208 = scmp.le.s32.totalorder 2, %s13
      // Predicated region
      $region33: #{tpu_custom_call.1} parent=5 // pred_check
        %p2209 = pneg %p2208
      $region34: #{tpu_custom_call.1} parent=5 // pred_check_branch
        %2211 = sbr.rel (%p2209) target = $region36
      $region35: #{tpu_custom_call.1} parent=5 // pred_region
        %s2212 = ssub.s32 %s13, 2
        // Predicated region
        $region37: #{tpu_custom_call.1} parent=35 // pred_check
          %p2213 = pneg %p68
        $region38: #{tpu_custom_call.1} parent=35 // pred_check_branch
          %2215 = sbr.rel (%p2213) target = $region40
        $region39: #{tpu_custom_call.1} parent=35 // pred_region
          %s2216 = sand.u32 %s53, 1
          %s2217 = scalar_lea.sflag [#allocation4], %s2216
          %s2218 = sand.u32 %s53, 1
          %s2219 = smul.addr %s2218, 8192
          %s2220 = scalar_lea.vmem [#allocation5], %s2219
          %2221 = dma.done %s2217, 131072
        $region40: #{tpu_custom_call.1} parent=35 // pred_fallthru
          _
      $region36: #{tpu_custom_call.1} parent=5 // pred_fallthru
        _
    $region6: #{tpu_custom_call.1} parent=1 // loop_footer
      %s17 = sadd.s32 1, %s13
    $region7: #{tpu_custom_call.1} parent=1 // loop_footer_branch
      %12 = sbr.rel target = $region3
    $region8: #{tpu_custom_call.1} parent=1 // loop_exit
      _
    %2222 = vsyncpa [#allocation3], 1
    %s2223 = scalar_lea.sflag [#allocation3], 1
    %2224 = vsyncpa %s2223, 1
    %2225 = vsyncpa [#allocation4], 1
    %s2226 = scalar_lea.sflag [#allocation4], 1
    %2227 = vsyncpa %s2226, 1

</llo_original>
